<compile_context>
chip_gen: v7x
topology: tpu7x:2x2x1
jax: 0.10.0
libtpu: 0.0.40
codegen_flags: <defaults>
</compile_context>

<pallas_src>
import functools

import jax
import jax.numpy as jnp
from jax import lax
from jax.experimental import pallas as pl
from jax.experimental.pallas import tpu as pltpu

_VMEM = pl.BlockSpec(memory_space=pltpu.MemorySpace.VMEM)
_VMEM_LIMIT = 32 * 1024 * 1024


# -------------------- banded conv-weight construction (prep) ---------------- #
def _banded_conv_weights(w_hwio, width, w_order):
    """Expand a (3,3,Cin,Cout) kernel into a (W*Cin, 3*W*Cout) banded matrix.

    Column block j (of width Cout) of the dy-th third produces output pixel
    w_order[j]; horizontal zero-padding is realized by simply omitting
    out-of-range taps (their rows don't exist)."""
    _, _, cin, cout = w_hwio.shape
    rows = width * cin
    cols = width * cout
    wc = jnp.arange(rows)[:, None] // cin          # input pixel per row
    ci = jnp.arange(rows)[:, None] % cin           # input channel per row
    j = jnp.arange(cols)[None, :] // cout          # output column block
    co = jnp.arange(cols)[None, :] % cout          # output channel per column
    w_pix = w_order[j]                             # output pixel per column block
    dx = wc - w_pix + 1                            # horizontal tap index
    valid = (dx >= 0) & (dx <= 2)
    dxc = jnp.clip(dx, 0, 2)
    mats = []
    for dy in range(3):
        vals = w_hwio[dy][dxc, ci, co]             # (rows, cols) gather
        mats.append(jnp.where(valid, vals, 0.0))
    return jnp.concatenate(mats, axis=1)           # [dy=0 | dy=1 | dy=2]


# ---------------- fused Conv3x3 + bias + ReLU (+ MaxPool2x2) ---------------- #
def _conv_block_kernel(x_ref, w_ref, b_ref, o_ref, *, width, cout, do_pool):
    x2 = x_ref[0]                                  # (H, W*Cin) folded NHWC slab
    h = x2.shape[0]
    l = width * cout
    # One MXU push: K = W*Cin, N = 3*W*Cout (banded weights, zero-pad folded in).
    z = jnp.dot(x2, w_ref[...], preferred_element_type=jnp.float32)
    z_top, z_mid, z_bot = z[:, :l], z[:, l:2 * l], z[:, 2 * l:]
    zero_row = jnp.zeros((1, l), jnp.float32)
    # Vertical taps: out[h] = z_top[h-1] + z_mid[h] + z_bot[h+1] (zero-pad rows).
    acc = (z_mid
           + jnp.concatenate([zero_row, z_top[:-1, :]], axis=0)
           + jnp.concatenate([z_bot[1:, :], zero_row], axis=0))
    acc = jnp.maximum(acc + b_ref[...], 0.0)       # bias + ReLU, f32 epilogue
    if do_pool:
        half = (width // 2) * cout
        # W-pool: banded columns are ordered [even-w | odd-w] -> lane-halves max.
        pooled = jnp.maximum(acc[:, :half], acc[:, half:])
        # H-pool: pair adjacent rows (minor-dim-preserving reshape).
        pooled = pooled.reshape(h // 2, 2, half)
        o_ref[0] = jnp.maximum(pooled[:, 0, :], pooled[:, 1, :])
    else:
        o_ref[0] = acc


def conv_block(x_fold, layer):
    n, h, wc = x_fold.shape
    cin, cout, width, do_pool = layer["cin"], layer["cout"], layer["width"], layer["pool"]
    assert wc == width * cin
    h_out = h // 2 if do_pool else h
    l_out = (width // 2 if do_pool else width) * cout
    k_dim, n_dim = layer["w"].shape
    flops = 2 * n * h * k_dim * n_dim
    bytes_acc = 4 * (x_fold.size + layer["w"].size + layer["b"].size + n * h_out * l_out)
    kern = functools.partial(_conv_block_kernel, width=width, cout=cout, do_pool=do_pool)
    # TODO(synk): for large images, also tile H with a 1-row halo; batch tiling
    # alone is enough for these small spatial sizes and keeps VMEM tiny.
    return pl.pallas_call(
        kern,
        out_shape=jax.ShapeDtypeStruct((n, h_out, l_out), jnp.float32),
        grid=(n,),
        in_specs=[
            pl.BlockSpec((1, h, wc), lambda i: (i, 0, 0)),
            pl.BlockSpec((k_dim, n_dim), lambda i: (0, 0)),
            pl.BlockSpec((1, width * cout), lambda i: (0, 0)),
        ],
        out_specs=pl.BlockSpec((1, h_out, l_out), lambda i: (i, 0, 0)),
        compiler_params=pltpu.CompilerParams(
            dimension_semantics=("parallel",),
            vmem_limit_bytes=_VMEM_LIMIT,
        ),
        cost_estimate=pl.CostEstimate(flops=flops, transcendentals=0,
                                      bytes_accessed=bytes_acc),
    )(x_fold, layer["w"], layer["b"])


# --------------------- fused classifier (MLP) in one call ------------------- #
def _classifier_kernel(*refs, num_layers):
    x_ref = refs[0]
    o_ref = refs[-1]
    h = x_ref[...]
    for i in range(num_layers):
        w = refs[1 + 2 * i][...]
        b = refs[2 + 2 * i][...]
        h = jnp.dot(h, w, preferred_element_type=jnp.float32) + b
        if i + 1 < num_layers:
            h = jnp.maximum(h, 0.0)
    o_ref[...] = h


def classifier(feats, lin_params):
    n = feats.shape[0]
    num_layers = len(lin_params)
    args = [feats]
    flops = 0
    bytes_acc = 4 * feats.size
    for w, b in lin_params:
        args.extend([w, b.reshape(1, -1)])
        flops += 2 * n * w.shape[0] * w.shape[1]
        bytes_acc += 4 * (w.size + b.size)
    out_dim = lin_params[-1][0].shape[1]
    bytes_acc += 4 * n * out_dim
    # TODO(synk): for larger batches, tile/pad M to multiples of 8 sublanes.
    return pl.pallas_call(
        functools.partial(_classifier_kernel, num_layers=num_layers),
        out_shape=jax.ShapeDtypeStruct((n, out_dim), jnp.float32),
        in_specs=[_VMEM] * len(args),
        out_specs=_VMEM,
        compiler_params=pltpu.CompilerParams(vmem_limit_bytes=_VMEM_LIMIT),
        cost_estimate=pl.CostEstimate(flops=flops, transcendentals=0,
                                      bytes_accessed=bytes_acc),
    )(*args)


# ----------------------------- Model definition ----------------------------- #
def init_params(key, in_size, out_classes, filters, pool_every, hidden_dims):
    _, h, w = in_size
    n_used = (len(filters) // pool_every) * pool_every  # torch builds N//P blocks of P convs
    convs = []
    in_ch = len(in_size)  # faithful to the PyTorch module's first Conv2d
    for f in filters[:n_used]:
        key, k1, k2 = jax.random.split(key, 3)
        convs.append((0.1 * jax.random.normal(k1, (3, 3, in_ch, f), jnp.float32),
                      0.1 * jax.random.normal(k2, (f,), jnp.float32)))
        in_ch = f
    # classifier input size, matching _make_classifier's arithmetic
    curr_w, curr_h = w, h
    for conv_num in range(1, len(filters) + 1):
        if conv_num % pool_every == 0:
            curr_w /= 2
            curr_h /= 2
    num_features = int(curr_w * curr_h * filters[-1])
    dims = [num_features] + list(hidden_dims) + [out_classes]
    lins = []
    for d_in, d_out in zip(dims[:-1], dims[1:]):
        key, k1, k2 = jax.random.split(key, 3)
        lins.append((0.1 * jax.random.normal(k1, (d_in, d_out), jnp.float32),
                     0.1 * jax.random.normal(k2, (d_out,), jnp.float32)))
    return {"conv": convs, "linear": lins}


def prepare_params(params, in_size, pool_every):
    """One-time weight transforms (banded conv matrices, folded bias, permuted
    first Linear) so the kernels need no wrapper-side pad/transpose."""
    _, h, w = in_size
    cin = len(in_size)
    conv_layers = []
    for i, (wk, bk) in enumerate(params["conv"]):
        cout = wk.shape[-1]
        do_pool = ((i + 1) % pool_every == 0)
        if do_pool:
            # TODO(synk): torch's MaxPool2d(2,2) floors odd sizes; even required here.
            assert h % 2 == 0 and w % 2 == 0
            w_order = jnp.concatenate([jnp.arange(0, w, 2), jnp.arange(1, w, 2)])
        else:
            w_order = jnp.arange(w)
        banded = _banded_conv_weights(wk, w, w_order)
        b_fold = jnp.tile(bk, (w,)).reshape(1, w * cout)
        conv_layers.append(dict(w=banded, b=b_fold, cin=cin, cout=cout,
                                width=w, pool=do_pool))
        cin = cout
        if do_pool:
            h //= 2
            w //= 2
    # Permute first Linear rows NCHW-flatten -> folded-NHWC order (kills the
    # pre-classifier activation transpose).
    cf = params["conv"][-1][0].shape[-1]
    hh, wwp, cc = jnp.meshgrid(jnp.arange(h), jnp.arange(w), jnp.arange(cf), indexing="ij")
    perm = (cc * h * w + hh * w + wwp).reshape(-1)
    lins = list(params["linear"])
    w1, b1 = lins[0]
    assert int(perm.shape[0]) == w1.shape[0]
    lins[0] = (w1[perm, :], b1)
    return dict(conv=conv_layers, linear=lins)


def conv_classifier_forward(x_nchw, prepped):
    n, c, h, w = x_nchw.shape
    # NCHW -> lane-dense folded NHWC (N, H, W*C); the reshape is free (contiguous).
    x = jnp.transpose(x_nchw, (0, 2, 3, 1)).reshape(n, h, w * c)
    for layer in prepped["conv"]:
        x = conv_block(x, layer)
    feats = x.reshape(n, -1)  # NHWC-order flatten (free); Linear rows pre-permuted
    return classifier(feats, prepped["linear"])


# ---------------------------- Pure-JAX reference ---------------------------- #
def reference_forward(x_nchw, params, pool_every):
    x = x_nchw
    for i, (w_hwio, b) in enumerate(params["conv"]):
        w_oihw = jnp.transpose(w_hwio, (3, 2, 0, 1))
        x = lax.conv_general_dilated(x, w_oihw, (1, 1), ((1, 1), (1, 1)),
                                     dimension_numbers=("NCHW", "OIHW", "NCHW"))
        x = jnp.maximum(x + b[None, :, None, None], 0.0)
        if (i + 1) % pool_every == 0:
            x = lax.reduce_window(x, -jnp.inf, lax.max,
                                  (1, 1, 2, 2), (1, 1, 2, 2), "VALID")
    feats = x.reshape(x.shape[0], -1)
    *hidden, last = params["linear"]
    for (w, b) in hidden:
        feats = jnp.maximum(feats @ w + b, 0.0)
    w, b = last
    return feats @ w + b


if __name__ == "__main__":
    in_size = (3, 16, 16)
    out_classes = 10
    filters = [8, 16]
    pool_every = 2
    hidden_dims = [32]
    batch = 2

    key = jax.random.PRNGKey(0)
    key, xk = jax.random.split(key)
    x = jax.random.normal(xk, (batch,) + in_size, jnp.float32)
    params = init_params(key, in_size, out_classes, filters, pool_every, hidden_dims)
    prepped = prepare_params(params, in_size, pool_every)

    fwd = jax.jit(lambda xx: conv_classifier_forward(xx, prepped))
    out = jax.block_until_ready(fwd(x))
    ref = jax.block_until_ready(reference_forward(x, params, pool_every))

    assert out.shape == (batch, out_classes), out.shape
    err = float(jnp.max(jnp.abs(out - ref)))
    assert jnp.allclose(out, ref, atol=2e-4, rtol=2e-4), err
    print("KERNEL_OK")
</pallas_src>

<mosaic_0001>
module attributes {stable_mosaic.version = 11 : i64} {
  func.func @_conv_block_kernel(%arg0: i32, %arg1: memref<1x16x128xf32, #tpu.memory_space<vmem>>, %arg2: memref<128x768xf32, #tpu.memory_space<vmem>>, %arg3: memref<1x256xf32, #tpu.memory_space<vmem>>, %arg4: memref<1x8x128xf32, #tpu.memory_space<vmem>>) attributes {dimension_semantics = [#tpu.dimension_semantics<parallel>], iteration_bounds = array<i64: 2>, scalar_prefetch = 0 : i64, scratch_operands = 0 : i64, tpu.core_type = #tpu.core_type<tc>, window_params = [{transform_indices = @transform_0, window_bounds = array<i64: 1, 16, 128>}, {pipeline_mode = #tpu.pipeline_mode<synchronous>, transform_indices = @transform_1, window_bounds = array<i64: 128, 768>}, {pipeline_mode = #tpu.pipeline_mode<synchronous>, transform_indices = @transform_2, window_bounds = array<i64: 1, 256>}, {transform_indices = @transform_3, window_bounds = array<i64: 1, 8, 128>}]} {
    %c0 = arith.constant 0 : index
    %c0_0 = arith.constant 0 : index
    %c0_1 = arith.constant 0 : index
    %0 = vector.load %arg1[%c0, %c0_0, %c0_1] : memref<1x16x128xf32, #tpu.memory_space<vmem>>, vector<1x16x128xf32>
    %1 = vector.shape_cast %0 : vector<1x16x128xf32> to vector<16x128xf32>
    %c0_2 = arith.constant 0 : index
    %c0_3 = arith.constant 0 : index
    %2 = vector.load %arg2[%c0_2, %c0_3] : memref<128x768xf32, #tpu.memory_space<vmem>>, vector<128x768xf32>
    %cst = arith.constant dense<0.000000e+00> : vector<16x768xf32>
    %3 = tpu.matmul %1, %2, %cst {dimension_numbers = #tpu.dot_dimension_numbers<[1], [0], [0], [1], [0, 0, 1, 1], [], []>} : vector<16x128xf32>, vector<128x768xf32>, vector<16x768xf32> -> vector<16x768xf32>
    %4 = vector.extract_strided_slice %3 {offsets = [0, 0], sizes = [16, 256], strides = [1, 1]} : vector<16x768xf32> to vector<16x256xf32>
    %5 = vector.extract_strided_slice %3 {offsets = [0, 256], sizes = [16, 256], strides = [1, 1]} : vector<16x768xf32> to vector<16x256xf32>
    %6 = vector.extract_strided_slice %3 {offsets = [0, 512], sizes = [16, 256], strides = [1, 1]} : vector<16x768xf32> to vector<16x256xf32>
    %cst_4 = arith.constant 0.000000e+00 : f32
    %7 = vector.broadcast %cst_4 : f32 to vector<1x256xf32>
    %8 = vector.extract_strided_slice %4 {offsets = [0, 0], sizes = [15, 256], strides = [1, 1]} : vector<16x256xf32> to vector<15x256xf32>
    %9 = tpu.concatenate %7, %8 in 0 : vector<1x256xf32>, vector<15x256xf32> -> vector<16x256xf32>
    %10 = arith.addf %5, %9 : vector<16x256xf32>
    %11 = vector.extract_strided_slice %6 {offsets = [1, 0], sizes = [15, 256], strides = [1, 1]} : vector<16x256xf32> to vector<15x256xf32>
    %12 = tpu.concatenate %11, %7 in 0 : vector<15x256xf32>, vector<1x256xf32> -> vector<16x256xf32>
    %13 = arith.addf %10, %12 : vector<16x256xf32>
    %c0_5 = arith.constant 0 : index
    %c0_6 = arith.constant 0 : index
    %14 = vector.load %arg3[%c0_5, %c0_6] : memref<1x256xf32, #tpu.memory_space<vmem>>, vector<1x256xf32>
    %15 = vector.broadcast %14 : vector<1x256xf32> to vector<16x256xf32>
    %16 = arith.addf %13, %15 : vector<16x256xf32>
    %cst_7 = arith.constant 0.000000e+00 : f32
    %17 = vector.broadcast %cst_7 : f32 to vector<16x256xf32>
    %18 = arith.maximumf %16, %17 : vector<16x256xf32>
    %19 = vector.extract_strided_slice %18 {offsets = [0, 0], sizes = [16, 128], strides = [1, 1]} : vector<16x256xf32> to vector<16x128xf32>
    %20 = vector.extract_strided_slice %18 {offsets = [0, 128], sizes = [16, 128], strides = [1, 1]} : vector<16x256xf32> to vector<16x128xf32>
    %21 = arith.maximumf %19, %20 : vector<16x128xf32>
    %22 = vector.shape_cast %21 : vector<16x128xf32> to vector<8x2x128xf32>
    %23 = vector.extract_strided_slice %22 {offsets = [0, 0, 0], sizes = [8, 1, 128], strides = [1, 1, 1]} : vector<8x2x128xf32> to vector<8x1x128xf32>
    %24 = vector.shape_cast %23 : vector<8x1x128xf32> to vector<8x128xf32>
    %25 = vector.extract_strided_slice %22 {offsets = [0, 1, 0], sizes = [8, 1, 128], strides = [1, 1, 1]} : vector<8x2x128xf32> to vector<8x1x128xf32>
    %26 = vector.shape_cast %25 : vector<8x1x128xf32> to vector<8x128xf32>
    %27 = arith.maximumf %24, %26 : vector<8x128xf32>
    %c0_8 = arith.constant 0 : index
    %c0_9 = arith.constant 0 : index
    %c0_10 = arith.constant 0 : index
    %28 = vector.load %arg4[%c0_8, %c0_9, %c0_10] : memref<1x8x128xf32, #tpu.memory_space<vmem>>, vector<1x8x128xf32>
    %29 = vector.shape_cast %28 : vector<1x8x128xf32> to vector<8x128xf32>
    %30 = vector.shape_cast %27 : vector<8x128xf32> to vector<1x8x128xf32>
    tpu.vector_store %arg4[%c0_8, %c0_9, %c0_10], %30 {strides = array<i32>} : memref<1x8x128xf32, #tpu.memory_space<vmem>>, vector<1x8x128xf32>,
    return
  }
  func.func @transform_0(%arg0: i32) -> (i32, i32, i32) {
    %c0_i32 = arith.constant 0 : i32
    %c0_i32_0 = arith.constant 0 : i32
    %c0_i32_1 = arith.constant 0 : i32
    return %arg0, %c0_i32, %c0_i32_0 : i32, i32, i32
  }
  func.func @transform_1(%arg0: i32) -> (i32, i32) {
    %c0_i32 = arith.constant 0 : i32
    %c0_i32_0 = arith.constant 0 : i32
    %c0_i32_1 = arith.constant 0 : i32
    return %c0_i32, %c0_i32_0 : i32, i32
  }
  func.func @transform_2(%arg0: i32) -> (i32, i32) {
    %c0_i32 = arith.constant 0 : i32
    %c0_i32_0 = arith.constant 0 : i32
    %c0_i32_1 = arith.constant 0 : i32
    return %c0_i32, %c0_i32_0 : i32, i32
  }
  func.func @transform_3(%arg0: i32) -> (i32, i32, i32) {
    %c0_i32 = arith.constant 0 : i32
    %c0_i32_0 = arith.constant 0 : i32
    %c0_i32_1 = arith.constant 0 : i32
    return %arg0, %c0_i32, %c0_i32_0 : i32, i32, i32
  }
}

module attributes {stable_mosaic.version = 11 : i64} {
  func.func @_conv_block_kernel(%arg0: i32, %arg1: memref<1x16x48xf32, #tpu.memory_space<vmem>>, %arg2: memref<48x384xf32, #tpu.memory_space<vmem>>, %arg3: memref<1x128xf32, #tpu.memory_space<vmem>>, %arg4: memref<1x16x128xf32, #tpu.memory_space<vmem>>) attributes {dimension_semantics = [#tpu.dimension_semantics<parallel>], iteration_bounds = array<i64: 2>, scalar_prefetch = 0 : i64, scratch_operands = 0 : i64, tpu.core_type = #tpu.core_type<tc>, window_params = [{transform_indices = @transform_0, window_bounds = array<i64: 1, 16, 48>}, {pipeline_mode = #tpu.pipeline_mode<synchronous>, transform_indices = @transform_1, window_bounds = array<i64: 48, 384>}, {pipeline_mode = #tpu.pipeline_mode<synchronous>, transform_indices = @transform_2, window_bounds = array<i64: 1, 128>}, {transform_indices = @transform_3, window_bounds = array<i64: 1, 16, 128>}]} {
    %c0 = arith.constant 0 : index
    %c0_0 = arith.constant 0 : index
    %c0_1 = arith.constant 0 : index
    %0 = vector.load %arg1[%c0, %c0_0, %c0_1] : memref<1x16x48xf32, #tpu.memory_space<vmem>>, vector<1x16x48xf32>
    %1 = vector.shape_cast %0 : vector<1x16x48xf32> to vector<16x48xf32>
    %c0_2 = arith.constant 0 : index
    %c0_3 = arith.constant 0 : index
    %2 = vector.load %arg2[%c0_2, %c0_3] : memref<48x384xf32, #tpu.memory_space<vmem>>, vector<48x384xf32>
    %cst = arith.constant dense<0.000000e+00> : vector<16x384xf32>
    %3 = tpu.matmul %1, %2, %cst {dimension_numbers = #tpu.dot_dimension_numbers<[1], [0], [0], [1], [0, 0, 1, 1], [], []>} : vector<16x48xf32>, vector<48x384xf32>, vector<16x384xf32> -> vector<16x384xf32>
    %4 = vector.extract_strided_slice %3 {offsets = [0, 0], sizes = [16, 128], strides = [1, 1]} : vector<16x384xf32> to vector<16x128xf32>
    %5 = vector.extract_strided_slice %3 {offsets = [0, 128], sizes = [16, 128], strides = [1, 1]} : vector<16x384xf32> to vector<16x128xf32>
    %6 = vector.extract_strided_slice %3 {offsets = [0, 256], sizes = [16, 128], strides = [1, 1]} : vector<16x384xf32> to vector<16x128xf32>
    %cst_4 = arith.constant 0.000000e+00 : f32
    %7 = vector.broadcast %cst_4 : f32 to vector<1x128xf32>
    %8 = vector.extract_strided_slice %4 {offsets = [0, 0], sizes = [15, 128], strides = [1, 1]} : vector<16x128xf32> to vector<15x128xf32>
    %9 = tpu.concatenate %7, %8 in 0 : vector<1x128xf32>, vector<15x128xf32> -> vector<16x128xf32>
    %10 = arith.addf %5, %9 : vector<16x128xf32>
    %11 = vector.extract_strided_slice %6 {offsets = [1, 0], sizes = [15, 128], strides = [1, 1]} : vector<16x128xf32> to vector<15x128xf32>
    %12 = tpu.concatenate %11, %7 in 0 : vector<15x128xf32>, vector<1x128xf32> -> vector<16x128xf32>
    %13 = arith.addf %10, %12 : vector<16x128xf32>
    %c0_5 = arith.constant 0 : index
    %c0_6 = arith.constant 0 : index
    %14 = vector.load %arg3[%c0_5, %c0_6] : memref<1x128xf32, #tpu.memory_space<vmem>>, vector<1x128xf32>
    %15 = vector.broadcast %14 : vector<1x128xf32> to vector<16x128xf32>
    %16 = arith.addf %13, %15 : vector<16x128xf32>
    %cst_7 = arith.constant 0.000000e+00 : f32
    %17 = vector.broadcast %cst_7 : f32 to vector<16x128xf32>
    %18 = arith.maximumf %16, %17 : vector<16x128xf32>
    %c0_8 = arith.constant 0 : index
    %c0_9 = arith.constant 0 : index
    %c0_10 = arith.constant 0 : index
    %19 = vector.load %arg4[%c0_8, %c0_9, %c0_10] : memref<1x16x128xf32, #tpu.memory_space<vmem>>, vector<1x16x128xf32>
    %20 = vector.shape_cast %19 : vector<1x16x128xf32> to vector<16x128xf32>
    %21 = vector.shape_cast %18 : vector<16x128xf32> to vector<1x16x128xf32>
    tpu.vector_store %arg4[%c0_8, %c0_9, %c0_10], %21 {strides = array<i32>} : memref<1x16x128xf32, #tpu.memory_space<vmem>>, vector<1x16x128xf32>,
    return
  }
  func.func @transform_0(%arg0: i32) -> (i32, i32, i32) {
    %c0_i32 = arith.constant 0 : i32
    %c0_i32_0 = arith.constant 0 : i32
    %c0_i32_1 = arith.constant 0 : i32
    return %arg0, %c0_i32, %c0_i32_0 : i32, i32, i32
  }
  func.func @transform_1(%arg0: i32) -> (i32, i32) {
    %c0_i32 = arith.constant 0 : i32
    %c0_i32_0 = arith.constant 0 : i32
    %c0_i32_1 = arith.constant 0 : i32
    return %c0_i32, %c0_i32_0 : i32, i32
  }
  func.func @transform_2(%arg0: i32) -> (i32, i32) {
    %c0_i32 = arith.constant 0 : i32
    %c0_i32_0 = arith.constant 0 : i32
    %c0_i32_1 = arith.constant 0 : i32
    return %c0_i32, %c0_i32_0 : i32, i32
  }
  func.func @transform_3(%arg0: i32) -> (i32, i32, i32) {
    %c0_i32 = arith.constant 0 : i32
    %c0_i32_0 = arith.constant 0 : i32
    %c0_i32_1 = arith.constant 0 : i32
    return %arg0, %c0_i32, %c0_i32_0 : i32, i32, i32
  }
}

module attributes {stable_mosaic.version = 11 : i64} {
  func.func @_classifier_kernel(%arg0: memref<2x1024xf32, #tpu.memory_space<vmem>>, %arg1: memref<1024x32xf32, #tpu.memory_space<vmem>>, %arg2: memref<1x32xf32, #tpu.memory_space<vmem>>, %arg3: memref<32x10xf32, #tpu.memory_space<vmem>>, %arg4: memref<1x10xf32, #tpu.memory_space<vmem>>, %arg5: memref<2x10xf32, #tpu.memory_space<vmem>>) attributes {dimension_semantics = [], scalar_prefetch = 0 : i64, scratch_operands = 0 : i64, tpu.core_type = #tpu.core_type<tc>} {
    %c0 = arith.constant 0 : index
    %c0_0 = arith.constant 0 : index
    %0 = vector.load %arg0[%c0, %c0_0] : memref<2x1024xf32, #tpu.memory_space<vmem>>, vector<2x1024xf32>
    %c0_1 = arith.constant 0 : index
    %c0_2 = arith.constant 0 : index
    %1 = vector.load %arg1[%c0_1, %c0_2] : memref<1024x32xf32, #tpu.memory_space<vmem>>, vector<1024x32xf32>
    %c0_3 = arith.constant 0 : index
    %c0_4 = arith.constant 0 : index
    %2 = vector.load %arg2[%c0_3, %c0_4] : memref<1x32xf32, #tpu.memory_space<vmem>>, vector<1x32xf32>
    %cst = arith.constant dense<0.000000e+00> : vector<2x32xf32>
    %3 = tpu.matmul %0, %1, %cst {dimension_numbers = #tpu.dot_dimension_numbers<[1], [0], [0], [1], [0, 0, 1, 1], [], []>} : vector<2x1024xf32>, vector<1024x32xf32>, vector<2x32xf32> -> vector<2x32xf32>
    %4 = vector.broadcast %2 : vector<1x32xf32> to vector<2x32xf32>
    %5 = arith.addf %3, %4 : vector<2x32xf32>
    %cst_5 = arith.constant 0.000000e+00 : f32
    %6 = vector.broadcast %cst_5 : f32 to vector<2x32xf32>
    %7 = arith.maximumf %5, %6 : vector<2x32xf32>
    %c0_6 = arith.constant 0 : index
    %c0_7 = arith.constant 0 : index
    %8 = vector.load %arg3[%c0_6, %c0_7] : memref<32x10xf32, #tpu.memory_space<vmem>>, vector<32x10xf32>
    %c0_8 = arith.constant 0 : index
    %c0_9 = arith.constant 0 : index
    %9 = vector.load %arg4[%c0_8, %c0_9] : memref<1x10xf32, #tpu.memory_space<vmem>>, vector<1x10xf32>
    %cst_10 = arith.constant dense<0.000000e+00> : vector<2x10xf32>
    %10 = tpu.matmul %7, %8, %cst_10 {dimension_numbers = #tpu.dot_dimension_numbers<[1], [0], [0], [1], [0, 0, 1, 1], [], []>} : vector<2x32xf32>, vector<32x10xf32>, vector<2x10xf32> -> vector<2x10xf32>
    %11 = vector.broadcast %9 : vector<1x10xf32> to vector<2x10xf32>
    %12 = arith.addf %10, %11 : vector<2x10xf32>
    %c0_11 = arith.constant 0 : index
    %c0_12 = arith.constant 0 : index
    %13 = vector.load %arg5[%c0_11, %c0_12] : memref<2x10xf32, #tpu.memory_space<vmem>>, vector<2x10xf32>
    tpu.vector_store %arg5[%c0_11, %c0_12], %12 {strides = array<i32>} : memref<2x10xf32, #tpu.memory_space<vmem>>, vector<2x10xf32>,
    return
  }
}

</mosaic_0001>

<llo_original>
// kernel: _lambda_.3
$region0: #{_lambda_.3}
  #allocation0 [shape = 'u32[]', space=smem, size = 0x4, offset = 0x4, fixed_abs, tag = 'smem constant byte address 0x4 - core index']
  #allocation1 [shape = 'u32[144,128]{1,0:T(1,128)}', space=vmem, size = 0x12000, scoped, tag = 'internal scratch']
  %s0 = inlined_call_operand.vmem [shape: f32[2,16,48], index: 0, kind: input, shape index: {}]
  %s1 = inlined_call_operand.vmem [shape: f32[48,384], index: 1, kind: input, shape index: {}]
  %s2 = inlined_call_operand.vmem [shape: f32[1,128], index: 2, kind: input, shape index: {}]
  %s3 = inlined_call_operand.vmem [shape: f32[2,16,128], index: 3, kind: output, shape index: {}]
  %s4 = sld [smem:[#allocation0]]
  $region45: #{_lambda_.3} parent=0
    _
  %s6 = ssub.s32 1, %s4
  %s7 = scalar_select 0, %s6, %s4
  loop: start=0, step=1, limit=4
  $region2: #{_lambda_.3} parent=0 // loop_pre_header
    _
  $region3: #{_lambda_.3} parent=0 // loop_header
    %s9 = sphi 0, %s13
    %p10 = scmp.ge.s32.totalorder %s9, 4
    %s19 = sphi 0, %s21
    %s22 = sphi 0, %s19
    %s23 = sphi 0, %s22
    %s39 = sphi 0, %s23
    %s43 = sphi 0, %s43
    %s45 = sphi 0, %s43
    %s46 = sphi 0, %s45
    %s60 = sphi 0, %s46
    %s64 = sphi 0, %s64
    %s66 = sphi 0, %s64
    %s67 = sphi 0, %s66
    %s81 = sphi 0, %s67
    %s87 = sphi 0, %s89
    %s90 = sphi 0, %s87
    %s91 = sphi 0, %s90
    %s107 = sphi 0, %s91
  $region4: #{_lambda_.3} parent=0 // loop_header_branch
    %12 = sbr.rel (%p10) target = $region8
  $region5: #{_lambda_.3} parent=0 // loop_body
    %s14 = ssub.s32 %s9, 1
    %s15 = ssub.s32 %s9, 2
    %s16 = sadd.s32 %s9, 1
    %s17 = ssub.s32 %s9, %s16
    %p18 = scmp.eq.s32.totalorder %s17, 0
    %s20 = sadd.s32 %s19, 1
    %s21 = scalar_select %p18, %s19, %s20
    %p24 = pneg %p18
    %p25 = scmp.eq.s32.totalorder %s9, 1
    %p26 = por %p24, %p25
    %p27 = scmp.ne.s32.totalorder %s19, %s22
    %p28 = scmp.eq.s32.totalorder %s9, 0
    %p29 = por %p27, %p28
    %p30 = scmp.ne.s32.totalorder %s19, %s22
    %p31 = scmp.eq.s32.totalorder %s14, 1
    %p32 = por %p30, %p31
    %p33 = scmp.ne.s32.totalorder %s22, %s23
    %p34 = scmp.eq.s32.totalorder %s14, 0
    %p35 = por %p33, %p34
    %p36 = scmp.ne.s32.totalorder %s22, %s23
    %p37 = scmp.eq.s32.totalorder %s15, 1
    %p38 = por %p36, %p37
    %p40 = scmp.ne.s32.totalorder %s23, %s39
    %p41 = scmp.eq.s32.totalorder %s15, 0
    %p42 = por %p40, %p41
    %s44 = sadd.s32 %s43, 1
    %p47 = scmp.eq.s32.totalorder %s9, 1
    %p48 = scmp.ne.s32.totalorder %s43, %s45
    %p49 = scmp.eq.s32.totalorder %s9, 0
    %p50 = por %p48, %p49
    %p51 = scmp.ne.s32.totalorder %s43, %s45
    %p52 = scmp.eq.s32.totalorder %s14, 1
    %p53 = por %p51, %p52
    %p54 = scmp.ne.s32.totalorder %s45, %s46
    %p55 = scmp.eq.s32.totalorder %s14, 0
    %p56 = por %p54, %p55
    %p57 = scmp.ne.s32.totalorder %s45, %s46
    %p58 = scmp.eq.s32.totalorder %s15, 1
    %p59 = por %p57, %p58
    %p61 = scmp.ne.s32.totalorder %s46, %s60
    %p62 = scmp.eq.s32.totalorder %s15, 0
    %p63 = por %p61, %p62
    %s65 = sadd.s32 %s64, 1
    %p68 = scmp.eq.s32.totalorder %s9, 1
    %p69 = scmp.ne.s32.totalorder %s64, %s66
    %p70 = scmp.eq.s32.totalorder %s9, 0
    %p71 = por %p69, %p70
    %p72 = scmp.ne.s32.totalorder %s64, %s66
    %p73 = scmp.eq.s32.totalorder %s14, 1
    %p74 = por %p72, %p73
    %p75 = scmp.ne.s32.totalorder %s66, %s67
    %p76 = scmp.eq.s32.totalorder %s14, 0
    %p77 = por %p75, %p76
    %p78 = scmp.ne.s32.totalorder %s66, %s67
    %p79 = scmp.eq.s32.totalorder %s15, 1
    %p80 = por %p78, %p79
    %p82 = scmp.ne.s32.totalorder %s67, %s81
    %p83 = scmp.eq.s32.totalorder %s15, 0
    %p84 = por %p82, %p83
    %s85 = ssub.s32 %s9, %s16
    %p86 = scmp.eq.s32.totalorder %s85, 0
    %s88 = sadd.s32 %s87, 1
    %s89 = scalar_select %p86, %s87, %s88
    %p92 = pneg %p86
    %p93 = scmp.eq.s32.totalorder %s9, 1
    %p94 = por %p92, %p93
    %p95 = scmp.ne.s32.totalorder %s87, %s90
    %p96 = scmp.eq.s32.totalorder %s9, 0
    %p97 = por %p95, %p96
    %p98 = scmp.ne.s32.totalorder %s87, %s90
    %p99 = scmp.eq.s32.totalorder %s14, 1
    %p100 = por %p98, %p99
    %p101 = scmp.ne.s32.totalorder %s90, %s91
    %p102 = scmp.eq.s32.totalorder %s14, 0
    %p103 = por %p101, %p102
    %p104 = scmp.ne.s32.totalorder %s90, %s91
    %p105 = scmp.eq.s32.totalorder %s15, 1
    %p106 = por %p104, %p105
    %p108 = scmp.ne.s32.totalorder %s91, %s107
    %p109 = scmp.eq.s32.totalorder %s15, 0
    %p110 = por %p108, %p109
    %p111 = scmp.le.s32.totalorder 1, %s9
    %p112 = scmp.lt.s32.totalorder %s9, 3
    %p113 = pnand %p111, %p112
    %p114 = pneg %p113
    // Predicated region
    $region9: #{_lambda_.3} parent=5 // pred_check
      _
    $region10: #{_lambda_.3} parent=5 // pred_check_branch
      %116 = sbr.rel (%p113) target = $region12
    $region11: #{_lambda_.3} parent=5 // pred_region
      %s117 = ssub.s32 %s9, 1
      // Predicated region
      $region13: #{_lambda_.3} parent=11 // pred_check
        %p118 = pneg %p56
      $region14: #{_lambda_.3} parent=11 // pred_check_branch
        %120 = sbr.rel (%p118) target = $region16
      $region15: #{_lambda_.3} parent=11 // pred_region
        _
      $region16: #{_lambda_.3} parent=11 // pred_fallthru
        _
      // Predicated region
      $region17: #{_lambda_.3} parent=11 // pred_check
        %p121 = pneg %p77
      $region18: #{_lambda_.3} parent=11 // pred_check_branch
        %123 = sbr.rel (%p121) target = $region20
      $region19: #{_lambda_.3} parent=11 // pred_region
        _
      $region20: #{_lambda_.3} parent=11 // pred_fallthru
        _
    $region12: #{_lambda_.3} parent=5 // pred_fallthru
      _
    %p124 = scmp.lt.s32.totalorder %s9, 2
    // Predicated region
    $region21: #{_lambda_.3} parent=5 // pred_check
      %p125 = pneg %p124
    $region22: #{_lambda_.3} parent=5 // pred_check_branch
      %127 = sbr.rel (%p125) target = $region24
    $region23: #{_lambda_.3} parent=5 // pred_region
      // Predicated region
      $region25: #{_lambda_.3} parent=23 // pred_check
        %p128 = pneg %p29
      $region26: #{_lambda_.3} parent=23 // pred_check_branch
        %130 = sbr.rel (%p128) target = $region28
      $region27: #{_lambda_.3} parent=23 // pred_region
        %p131 = scmp.lt.s32.totalorder %s9, 1
        %s132 = scalar_select %p131, %s9, 1
        %s133 = smul.addr %s132, 2
        %s134 = smul.addr %s133, 8
        %s135 = scalar_lea.vmem %s0, %s134
      $region28: #{_lambda_.3} parent=23 // pred_fallthru
        _
    $region24: #{_lambda_.3} parent=5 // pred_fallthru
      _
    %p136 = scmp.le.s32.totalorder 1, %s9
    %p137 = scmp.lt.s32.totalorder %s9, 3
    %p138 = pnand %p136, %p137
    %p139 = pneg %p138
    // Predicated region
    $region29: #{_lambda_.3} parent=5 // pred_check
      _
    $region30: #{_lambda_.3} parent=5 // pred_check_branch
      %141 = sbr.rel (%p138) target = $region32
    $region31: #{_lambda_.3} parent=5 // pred_region
      %s142 = ssub.s32 %s9, 1
      %p143 = scmp.lt.s32.totalorder %s14, 1
      %s144 = scalar_select %p143, %s14, 1
      %s145 = smul.addr %s144, 2
      %s146 = smul.addr %s145, 8
      %s147 = scalar_lea.vmem %s0, %s146
      %p148 = pneg %p35
      %p149 = pneg %p32
      %p150 = pneg %p56
      %p151 = pneg %p53
      %p152 = pneg %p77
      %p153 = pneg %p74
      %p154 = pneg %p103
      %p155 = pneg %p100
      %p156 = scmp.lt.s32.totalorder %s14, 1
      %s157 = scalar_select %p156, %s14, 1
      %s158 = smul.addr %s157, 2
      %s159 = smul.addr %s158, 8
      %s160 = scalar_lea.vmem %s3, %s159
      %p161 = scmp.lt.s32.totalorder %s14, 1
      %s162 = scalar_select %p161, %s14, 1
      %s163 = smul.addr %s162, 2
      %s164 = smul.addr %s163, 8
      %s165 = scalar_lea.vmem %s0, %s164
      %p166 = scmp.lt.s32.totalorder %s14, 1
      %s167 = scalar_select %p166, %s14, 1
      %s168 = smul.addr %s167, 2
      %s169 = smul.addr %s168, 8
      %s170 = scalar_lea.vmem %s3, %s169
      %v171 = vld [vmem:[%s165] sm:$0xff]
      %v172 = vld [vmem:[%s165 + $0x8] sm:$0xff]
      %v173 = vld [vmem:[%s1] sm:$0xff]
      %v174 = vld [vmem:[%s1 + $0x8] sm:$0xff]
      %v175 = vld [vmem:[%s1 + $0x10] sm:$0xff]
      %v176 = vld [vmem:[%s1 + $0x18] sm:$0xff]
      %v177 = vld [vmem:[%s1 + $0x20] sm:$0xff]
      %v178 = vld [vmem:[%s1 + $0x28] sm:$0xff]
      %v179 = vld [vmem:[%s1 + $0x30] sm:$0xff]
      %v180 = vld [vmem:[%s1 + $0x38] sm:$0xff]
      %v181 = vld [vmem:[%s1 + $0x40] sm:$0xff]
      %v182 = vld [vmem:[%s1 + $0x48] sm:$0xff]
      %v183 = vld [vmem:[%s1 + $0x50] sm:$0xff]
      %v184 = vld [vmem:[%s1 + $0x58] sm:$0xff]
      %v185 = vld [vmem:[%s1 + $0x60] sm:$0xff]
      %v186 = vld [vmem:[%s1 + $0x68] sm:$0xff]
      %v187 = vld [vmem:[%s1 + $0x70] sm:$0xff]
      %v188 = vld [vmem:[%s1 + $0x78] sm:$0xff]
      %v189 = vld [vmem:[%s1 + $0x80] sm:$0xff]
      %v190 = vld [vmem:[%s1 + $0x88] sm:$0xff]
      %vm191 = vcmask 392192
      %v193 = vsel %vm191, %v171, 0
      %v196 = vsel %vm191, %v172, 0
      %198 = vmatprep.subr.mxu0 %v174
      %199 = vmatpush1.msra.mxu0 %v173
      %200 = vmatprep.subr.mxu0 %v177
      %201 = vmatpush1.msra.mxu0 %v176
      %202 = vmatprep.subr.mxu0 %v180
      %203 = vmatpush1.msra.mxu0 %v179
      %204 = vmatprep.subr.mxu0 %v183
      %205 = vmatpush1.msra.mxu0 %v182
      %206 = vmatprep.subr.mxu0 %v186
      %207 = vmatpush1.msra.mxu0 %v185
      %208 = vmatprep.subr.mxu0 %v189
      %209 = vmatpush1.msra.mxu0 %v188
      %210 = vmatprep.subr.mxu0 0.0
      %211 = vmatpush1.msra.mxu0 0.0
      %212 = vmatprep.subr.mxu0 0.0
      %213 = vmatpush1.msra.mxu0 0.0
      %214 = vmatprep.subr.mxu0 0.0
      %215 = vmatpush1.msra.mxu0 0.0
      %216 = vmatprep.subr.mxu0 0.0
      %217 = vmatpush1.msra.mxu0 0.0
      %218 = vmatprep.subr.mxu0 0.0
      %219 = vmatpush1.msra.mxu0 0.0
      %220 = vmatprep.subr.mxu0 0.0
      %221 = vmatpush1.msra.mxu0 0.0
      %222 = vmatprep.subr.mxu0 0.0
      %223 = vmatpush1.msra.mxu0 0.0
      %224 = vmatprep.subr.mxu0 0.0
      %225 = vmatpush1.msra.mxu0 0.0
      %226 = vmatprep.subr.mxu0 0.0
      %227 = vmatpush1.msra.mxu0 0.0
      %228 = vmatprep.subr.mxu0 0.0
      %229 = vmatpush1.msra.mxu0 0.0
      %230 = vmatprep.subr.mxu0 0.0
      %231 = vmatpush1.msra.mxu0 0.0
      %232 = vmatprep.subr.mxu0 0.0
      %233 = vmatpush1.msra.mxu0 0.0
      %234 = vmatprep.subr.mxu0 0.0
      %235 = vmatpush1.msra.mxu0 0.0
      %236 = vmatprep.subr.mxu0 0.0
      %237 = vmatpush1.msra.mxu0 0.0
      %238 = vmatprep.subr.mxu0 0.0
      %239 = vmatpush1.msra.mxu0 0.0
      %240 = vmatprep.subr.mxu0 0.0
      %241 = vmatpush1.msra.mxu0 0.0
      %242 = vmatprep.subr.mxu0 0.0
      %243 = vmatpush1.msra.mxu0 0.0
      %244 = vmatprep.subr.mxu0 0.0
      %245 = vmatpush1.msra.mxu0 0.0
      %246 = vmatprep.subr.mxu0 0.0
      %247 = vmatpush1.msra.mxu0 0.0
      %248 = vmatprep.subr.mxu0 0.0
      %249 = vmatpush1.msra.mxu0 0.0
      %250 = vmatprep.subr.mxu0 0.0
      %251 = vmatpush1.msra.mxu0 0.0
      %252 = vmatprep.subr.mxu0 0.0
      %253 = vmatpush1.msra.mxu0 0.0
      %254 = vmatprep.subr.mxu0 0.0
      %255 = vmatpush1.msra.mxu0 0.0
      %256 = vmatprep.subr.mxu0 0.0
      %257 = vmatpush1.msra.mxu0 0.0
      %258 = vmatprep.subr.mxu0 0.0
      %259 = vmatpush1.msra.mxu0 0.0
      %260 = vmatprep.subr.mxu0 0.0
      %261 = vmatpush1.msra.mxu0 0.0
      %262 = vmatprep.mubr.f32.mxu0 0.0
      %263 = vmatmul.mubr.f32.gmra.mrb[0].mxu0 %v193
      %v264 = vpop.f32.mrb[0].mxu0
      %v265 = vadd.f32 0.0, %v264
      %v266 = vpop.f32.mrb[0].mxu0
      %v267 = vadd.f32 0.0, %v266
      %268 = vmatprep.mubr.f32.mxu0 0.0
      %269 = vmatmul.mubr.f32.gmra.mrb[0].mxu0 %v196
      %v270 = vpop.f32.mrb[0].mxu0
      %v271 = vadd.f32 0.0, %v270
      %v272 = vpop.f32.mrb[0].mxu0
      %v273 = vadd.f32 0.0, %v272
      %274 = vdwg.mxu0
      %275 = vmatprep.subr.mxu0 0.0
      %276 = vmatpush1.msra.mxu0 %v175
      %277 = vmatprep.subr.mxu0 0.0
      %278 = vmatpush1.msra.mxu0 %v178
      %279 = vmatprep.subr.mxu0 0.0
      %280 = vmatpush1.msra.mxu0 %v181
      %281 = vmatprep.subr.mxu0 0.0
      %282 = vmatpush1.msra.mxu0 %v184
      %283 = vmatprep.subr.mxu0 0.0
      %284 = vmatpush1.msra.mxu0 %v187
      %285 = vmatprep.subr.mxu0 0.0
      %286 = vmatpush1.msra.mxu0 %v190
      %287 = vmatprep.subr.mxu0 0.0
      %288 = vmatpush1.msra.mxu0 0.0
      %289 = vmatprep.subr.mxu0 0.0
      %290 = vmatpush1.msra.mxu0 0.0
      %291 = vmatprep.subr.mxu0 0.0
      %292 = vmatpush1.msra.mxu0 0.0
      %293 = vmatprep.subr.mxu0 0.0
      %294 = vmatpush1.msra.mxu0 0.0
      %295 = vmatprep.subr.mxu0 0.0
      %296 = vmatpush1.msra.mxu0 0.0
      %297 = vmatprep.subr.mxu0 0.0
      %298 = vmatpush1.msra.mxu0 0.0
      %299 = vmatprep.subr.mxu0 0.0
      %300 = vmatpush1.msra.mxu0 0.0
      %301 = vmatprep.subr.mxu0 0.0
      %302 = vmatpush1.msra.mxu0 0.0
      %303 = vmatprep.subr.mxu0 0.0
      %304 = vmatpush1.msra.mxu0 0.0
      %305 = vmatprep.subr.mxu0 0.0
      %306 = vmatpush1.msra.mxu0 0.0
      %307 = vmatprep.subr.mxu0 0.0
      %308 = vmatpush1.msra.mxu0 0.0
      %309 = vmatprep.subr.mxu0 0.0
      %310 = vmatpush1.msra.mxu0 0.0
      %311 = vmatprep.subr.mxu0 0.0
      %312 = vmatpush1.msra.mxu0 0.0
      %313 = vmatprep.subr.mxu0 0.0
      %314 = vmatpush1.msra.mxu0 0.0
      %315 = vmatprep.subr.mxu0 0.0
      %316 = vmatpush1.msra.mxu0 0.0
      %317 = vmatprep.subr.mxu0 0.0
      %318 = vmatpush1.msra.mxu0 0.0
      %319 = vmatprep.subr.mxu0 0.0
      %320 = vmatpush1.msra.mxu0 0.0
      %321 = vmatprep.subr.mxu0 0.0
      %322 = vmatpush1.msra.mxu0 0.0
      %323 = vmatprep.subr.mxu0 0.0
      %324 = vmatpush1.msra.mxu0 0.0
      %325 = vmatprep.subr.mxu0 0.0
      %326 = vmatpush1.msra.mxu0 0.0
      %327 = vmatprep.subr.mxu0 0.0
      %328 = vmatpush1.msra.mxu0 0.0
      %329 = vmatprep.subr.mxu0 0.0
      %330 = vmatpush1.msra.mxu0 0.0
      %331 = vmatprep.subr.mxu0 0.0
      %332 = vmatpush1.msra.mxu0 0.0
      %333 = vmatprep.subr.mxu0 0.0
      %334 = vmatpush1.msra.mxu0 0.0
      %335 = vmatprep.subr.mxu0 0.0
      %336 = vmatpush1.msra.mxu0 0.0
      %337 = vmatprep.subr.mxu0 0.0
      %338 = vmatpush1.msra.mxu0 0.0
      %339 = vmatprep.mubr.f32.mxu0 0.0
      %340 = vmatmul.mubr.f32.gmra.mrb[0].mxu0 %v193
      %v341 = vpop.f32.mrb[0].mxu0
      %v342 = vadd.f32 0.0, %v341
      %v343 = vpop.f32.mrb[0].mxu0
      %344 = vmatprep.mubr.f32.mxu0 0.0
      %345 = vmatmul.mubr.f32.gmra.mrb[0].mxu0 %v196
      %v346 = vpop.f32.mrb[0].mxu0
      %v347 = vadd.f32 0.0, %v346
      %v348 = vpop.f32.mrb[0].mxu0
      %349 = vdwg.mxu0
      %vm352 = vcmask 1040384
      %v353 = vrot.slane %v265, 7
      %v354 = vrot.slane %v271, 7
      %v355 = vsel %vm352, %v353, %v354
      %v358 = vsel %vm352, 0.0, %v353
      %v359 = vadd.f32 %v267, %v358
      %v360 = vadd.f32 %v273, %v355
      %vm363 = vcmask 1046528
      %v364 = vrot.slane %v342, 1
      %v365 = vrot.slane %v347, 1
      %v366 = vsel %vm363, %v364, %v365
      %v369 = vsel %vm363, %v365, 0.0
      %v370 = vadd.f32 %v359, %v366
      %v371 = vadd.f32 %v360, %v369
      %v372 = vld [vmem:[%s2] sm:$0x1]
      %v374 = vlaneseq
      %v375 = vshrl.u32 %v374, 7
      %v376 = vsub.s32 0, %v375
      %v377 = vrot.slane %v372, %v376
      %v379 = vadd.f32 %v370, %v377
      %v380 = vadd.f32 %v371, %v377
      %v381 = vmax.f32 %v379, 0.0
      %v382 = vmax.f32 %v380, 0.0
      %383 = vst [vmem:[%s170] sm:$0xff] %v381
      %384 = vst [vmem:[%s170 + $0x8] sm:$0xff] %v382
      %p385 = scmp.lt.s32.totalorder %s14, 1
      %s386 = scalar_select %p385, %s14, 1
      %s387 = smul.addr %s386, 2
      %s388 = smul.addr %s387, 8
      %s389 = scalar_lea.vmem %s3, %s388
      // Predicated region
      $region33: #{_lambda_.3} parent=31 // pred_check
        %p390 = pneg %p100
      $region34: #{_lambda_.3} parent=31 // pred_check_branch
        %392 = sbr.rel (%p390) target = $region36
      $region35: #{_lambda_.3} parent=31 // pred_region
        _
      $region36: #{_lambda_.3} parent=31 // pred_fallthru
        _
    $region32: #{_lambda_.3} parent=5 // pred_fallthru
      _
    %p393 = scmp.le.s32.totalorder 2, %s9
    // Predicated region
    $region37: #{_lambda_.3} parent=5 // pred_check
      %p394 = pneg %p393
    $region38: #{_lambda_.3} parent=5 // pred_check_branch
      %396 = sbr.rel (%p394) target = $region40
    $region39: #{_lambda_.3} parent=5 // pred_region
      %s397 = ssub.s32 %s9, 2
      // Predicated region
      $region41: #{_lambda_.3} parent=39 // pred_check
        %p398 = pneg %p106
      $region42: #{_lambda_.3} parent=39 // pred_check_branch
        %400 = sbr.rel (%p398) target = $region44
      $region43: #{_lambda_.3} parent=39 // pred_region
        %p401 = scmp.lt.s32.totalorder %s15, 1
        %s402 = scalar_select %p401, %s15, 1
        %s403 = smul.addr %s402, 2
        %s404 = smul.addr %s403, 8
        %s405 = scalar_lea.vmem %s3, %s404
      $region44: #{_lambda_.3} parent=39 // pred_fallthru
        _
    $region40: #{_lambda_.3} parent=5 // pred_fallthru
      _
  $region6: #{_lambda_.3} parent=0 // loop_footer
    %s13 = sadd.s32 1, %s9
  $region7: #{_lambda_.3} parent=0 // loop_footer_branch
    %8 = sbr.rel target = $region3
  $region8: #{_lambda_.3} parent=0 // loop_exit
    _

// kernel: _lambda_.4
$region0: #{_lambda_.4}
  #allocation0 [shape = 'u32[]', space=smem, size = 0x4, offset = 0x4, fixed_abs, tag = 'smem constant byte address 0x4 - core index']
  #allocation1 [shape = 'u32[144,128]{1,0:T(1,128)}', space=vmem, size = 0x12000, scoped, tag = 'internal scratch']
  %s0 = inlined_call_operand.vmem [shape: f32[2,16,128], index: 0, kind: input, shape index: {}]
  %s1 = inlined_call_operand.hbm [shape: f32[128,768], index: 1, kind: input, shape index: {}]
  %s2 = inlined_call_operand.vmem [shape: f32[1,256], index: 2, kind: input, shape index: {}]
  %s3 = inlined_call_operand.vmem [shape: f32[2,8,128], index: 3, kind: output, shape index: {}]
  %s4 = sld [smem:[#allocation0]]
  $region49: #{_lambda_.4} parent=0
    _
  %s6 = ssub.s32 1, %s4
  %s7 = scalar_select 0, %s6, %s4
  $region1: #{_lambda_.4} parent=0
    #allocation2 [shape = 'u8[393216]{0}', space=vmem, size = 0x60000, scoped, tag = 'input window, operand 1, single buffered']
    #allocation3 [shape = 's32[2]{0}', space=sflag, size = 0x8, scoped, tag = 'scoped memory for _lambda_.4']
    %8 = vsyncpa [#allocation3], 0
    loop: start=0, step=1, limit=4
    $region2: #{_lambda_.4} parent=1 // loop_pre_header
      _
    $region3: #{_lambda_.4} parent=1 // loop_header
      %s10 = sphi 0, %s14
      %p11 = scmp.ge.s32.totalorder %s10, 4
      %s20 = sphi 0, %s22
      %s23 = sphi 0, %s20
      %s24 = sphi 0, %s23
      %s40 = sphi 0, %s24
      %s44 = sphi 0, %s44
      %s46 = sphi 0, %s44
      %s47 = sphi 0, %s46
      %s61 = sphi 0, %s47
      %s65 = sphi 0, %s65
      %s67 = sphi 0, %s65
      %s68 = sphi 0, %s67
      %s82 = sphi 0, %s68
      %s88 = sphi 0, %s90
      %s91 = sphi 0, %s88
      %s92 = sphi 0, %s91
      %s108 = sphi 0, %s92
    $region4: #{_lambda_.4} parent=1 // loop_header_branch
      %13 = sbr.rel (%p11) target = $region8
    $region5: #{_lambda_.4} parent=1 // loop_body
      %s15 = ssub.s32 %s10, 1
      %s16 = ssub.s32 %s10, 2
      %s17 = sadd.s32 %s10, 1
      %s18 = ssub.s32 %s10, %s17
      %p19 = scmp.eq.s32.totalorder %s18, 0
      %s21 = sadd.s32 %s20, 1
      %s22 = scalar_select %p19, %s20, %s21
      %p25 = pneg %p19
      %p26 = scmp.eq.s32.totalorder %s10, 1
      %p27 = por %p25, %p26
      %p28 = scmp.ne.s32.totalorder %s20, %s23
      %p29 = scmp.eq.s32.totalorder %s10, 0
      %p30 = por %p28, %p29
      %p31 = scmp.ne.s32.totalorder %s20, %s23
      %p32 = scmp.eq.s32.totalorder %s15, 1
      %p33 = por %p31, %p32
      %p34 = scmp.ne.s32.totalorder %s23, %s24
      %p35 = scmp.eq.s32.totalorder %s15, 0
      %p36 = por %p34, %p35
      %p37 = scmp.ne.s32.totalorder %s23, %s24
      %p38 = scmp.eq.s32.totalorder %s16, 1
      %p39 = por %p37, %p38
      %p41 = scmp.ne.s32.totalorder %s24, %s40
      %p42 = scmp.eq.s32.totalorder %s16, 0
      %p43 = por %p41, %p42
      %s45 = sadd.s32 %s44, 1
      %p48 = scmp.eq.s32.totalorder %s10, 1
      %p49 = scmp.ne.s32.totalorder %s44, %s46
      %p50 = scmp.eq.s32.totalorder %s10, 0
      %p51 = por %p49, %p50
      %p52 = scmp.ne.s32.totalorder %s44, %s46
      %p53 = scmp.eq.s32.totalorder %s15, 1
      %p54 = por %p52, %p53
      %p55 = scmp.ne.s32.totalorder %s46, %s47
      %p56 = scmp.eq.s32.totalorder %s15, 0
      %p57 = por %p55, %p56
      %p58 = scmp.ne.s32.totalorder %s46, %s47
      %p59 = scmp.eq.s32.totalorder %s16, 1
      %p60 = por %p58, %p59
      %p62 = scmp.ne.s32.totalorder %s47, %s61
      %p63 = scmp.eq.s32.totalorder %s16, 0
      %p64 = por %p62, %p63
      %s66 = sadd.s32 %s65, 1
      %p69 = scmp.eq.s32.totalorder %s10, 1
      %p70 = scmp.ne.s32.totalorder %s65, %s67
      %p71 = scmp.eq.s32.totalorder %s10, 0
      %p72 = por %p70, %p71
      %p73 = scmp.ne.s32.totalorder %s65, %s67
      %p74 = scmp.eq.s32.totalorder %s15, 1
      %p75 = por %p73, %p74
      %p76 = scmp.ne.s32.totalorder %s67, %s68
      %p77 = scmp.eq.s32.totalorder %s15, 0
      %p78 = por %p76, %p77
      %p79 = scmp.ne.s32.totalorder %s67, %s68
      %p80 = scmp.eq.s32.totalorder %s16, 1
      %p81 = por %p79, %p80
      %p83 = scmp.ne.s32.totalorder %s68, %s82
      %p84 = scmp.eq.s32.totalorder %s16, 0
      %p85 = por %p83, %p84
      %s86 = ssub.s32 %s10, %s17
      %p87 = scmp.eq.s32.totalorder %s86, 0
      %s89 = sadd.s32 %s88, 1
      %s90 = scalar_select %p87, %s88, %s89
      %p93 = pneg %p87
      %p94 = scmp.eq.s32.totalorder %s10, 1
      %p95 = por %p93, %p94
      %p96 = scmp.ne.s32.totalorder %s88, %s91
      %p97 = scmp.eq.s32.totalorder %s10, 0
      %p98 = por %p96, %p97
      %p99 = scmp.ne.s32.totalorder %s88, %s91
      %p100 = scmp.eq.s32.totalorder %s15, 1
      %p101 = por %p99, %p100
      %p102 = scmp.ne.s32.totalorder %s91, %s92
      %p103 = scmp.eq.s32.totalorder %s15, 0
      %p104 = por %p102, %p103
      %p105 = scmp.ne.s32.totalorder %s91, %s92
      %p106 = scmp.eq.s32.totalorder %s16, 1
      %p107 = por %p105, %p106
      %p109 = scmp.ne.s32.totalorder %s92, %s108
      %p110 = scmp.eq.s32.totalorder %s16, 0
      %p111 = por %p109, %p110
      %p112 = scmp.le.s32.totalorder 1, %s10
      %p113 = scmp.lt.s32.totalorder %s10, 3
      %p114 = pnand %p112, %p113
      %p115 = pneg %p114
      // Predicated region
      $region9: #{_lambda_.4} parent=5 // pred_check
        _
      $region10: #{_lambda_.4} parent=5 // pred_check_branch
        %117 = sbr.rel (%p114) target = $region12
      $region11: #{_lambda_.4} parent=5 // pred_region
        %s118 = ssub.s32 %s10, 1
        // Predicated region
        $region13: #{_lambda_.4} parent=11 // pred_check
          %p119 = pneg %p57
        $region14: #{_lambda_.4} parent=11 // pred_check_branch
          %121 = sbr.rel (%p119) target = $region16
        $region15: #{_lambda_.4} parent=11 // pred_region
          %s123 = ssub.s32 12288, 12288
          %124 = vsyncadd [#allocation3], %s123
          %s125 = sshll.u32 [#allocation2], 4
          %s126 = int_to_ptr.vmem [resolvable:$true] %s125
          %131 = dma.hbm_to_vmem [thread:$0]  %s1, 12288, %s126, [#allocation3], 768, 768, 48
        $region16: #{_lambda_.4} parent=11 // pred_fallthru
          _
        // Predicated region
        $region17: #{_lambda_.4} parent=11 // pred_check
          %p132 = pneg %p78
        $region18: #{_lambda_.4} parent=11 // pred_check_branch
          %134 = sbr.rel (%p132) target = $region20
        $region19: #{_lambda_.4} parent=11 // pred_region
          _
        $region20: #{_lambda_.4} parent=11 // pred_fallthru
          _
      $region12: #{_lambda_.4} parent=5 // pred_fallthru
        _
      %p135 = scmp.lt.s32.totalorder %s10, 2
      // Predicated region
      $region21: #{_lambda_.4} parent=5 // pred_check
        %p136 = pneg %p135
      $region22: #{_lambda_.4} parent=5 // pred_check_branch
        %138 = sbr.rel (%p136) target = $region24
      $region23: #{_lambda_.4} parent=5 // pred_region
        // Predicated region
        $region25: #{_lambda_.4} parent=23 // pred_check
          %p139 = pneg %p30
        $region26: #{_lambda_.4} parent=23 // pred_check_branch
          %141 = sbr.rel (%p139) target = $region28
        $region27: #{_lambda_.4} parent=23 // pred_region
          %p142 = scmp.lt.s32.totalorder %s10, 1
          %s143 = scalar_select %p142, %s10, 1
          %s144 = smul.addr %s143, 2
          %s145 = smul.addr %s144, 8
          %s146 = scalar_lea.vmem %s0, %s145
        $region28: #{_lambda_.4} parent=23 // pred_fallthru
          _
      $region24: #{_lambda_.4} parent=5 // pred_fallthru
        _
      %p147 = scmp.le.s32.totalorder 1, %s10
      %p148 = scmp.lt.s32.totalorder %s10, 3
      %p149 = pnand %p147, %p148
      %p150 = pneg %p149
      // Predicated region
      $region29: #{_lambda_.4} parent=5 // pred_check
        _
      $region30: #{_lambda_.4} parent=5 // pred_check_branch
        %152 = sbr.rel (%p149) target = $region32
      $region31: #{_lambda_.4} parent=5 // pred_region
        %s153 = ssub.s32 %s10, 1
        // Predicated region
        $region33: #{_lambda_.4} parent=31 // pred_check
          %p154 = pneg %p57
        $region34: #{_lambda_.4} parent=31 // pred_check_branch
          %156 = sbr.rel (%p154) target = $region36
        $region35: #{_lambda_.4} parent=31 // pred_region
          %157 = dma.done [#allocation3], 12288
        $region36: #{_lambda_.4} parent=31 // pred_fallthru
          _
        %p158 = scmp.lt.s32.totalorder %s15, 1
        %s159 = scalar_select %p158, %s15, 1
        %s160 = smul.addr %s159, 2
        %s161 = smul.addr %s160, 8
        %s162 = scalar_lea.vmem %s0, %s161
        %p163 = pneg %p36
        %p164 = pneg %p33
        %p165 = pneg %p57
        %p166 = pneg %p54
        %p167 = pneg %p78
        %p168 = pneg %p75
        %p169 = pneg %p104
        %p170 = pneg %p101
        %p171 = scmp.lt.s32.totalorder %s15, 1
        %s172 = scalar_select %p171, %s15, 1
        %s173 = smul.addr %s172, 8
        %s174 = scalar_lea.vmem %s3, %s173
        %p175 = scmp.lt.s32.totalorder %s15, 1
        %s176 = scalar_select %p175, %s15, 1
        %s177 = smul.addr %s176, 2
        %s178 = smul.addr %s177, 8
        %s179 = scalar_lea.vmem %s0, %s178
        %p180 = scmp.lt.s32.totalorder %s15, 1
        %s181 = scalar_select %p180, %s15, 1
        %s182 = smul.addr %s181, 8
        %s183 = scalar_lea.vmem %s3, %s182
        %v184 = vld [vmem:[%s179] sm:$0xff]
        %v185 = vld [vmem:[%s179 + $0x8] sm:$0xff]
        %v186 = vld [vmem:[#allocation2] sm:$0xff]
        %v187 = vld [vmem:[#allocation2 + $0x8] sm:$0xff]
        %v188 = vld [vmem:[#allocation2 + $0x10] sm:$0xff]
        %v189 = vld [vmem:[#allocation2 + $0x18] sm:$0xff]
        %v190 = vld [vmem:[#allocation2 + $0x20] sm:$0xff]
        %v191 = vld [vmem:[#allocation2 + $0x28] sm:$0xff]
        %v192 = vld [vmem:[#allocation2 + $0x30] sm:$0xff]
        %v193 = vld [vmem:[#allocation2 + $0x38] sm:$0xff]
        %v194 = vld [vmem:[#allocation2 + $0x40] sm:$0xff]
        %v195 = vld [vmem:[#allocation2 + $0x48] sm:$0xff]
        %v196 = vld [vmem:[#allocation2 + $0x50] sm:$0xff]
        %v197 = vld [vmem:[#allocation2 + $0x58] sm:$0xff]
        %v198 = vld [vmem:[#allocation2 + $0x60] sm:$0xff]
        %v199 = vld [vmem:[#allocation2 + $0x68] sm:$0xff]
        %v200 = vld [vmem:[#allocation2 + $0x70] sm:$0xff]
        %v201 = vld [vmem:[#allocation2 + $0x78] sm:$0xff]
        %v202 = vld [vmem:[#allocation2 + $0x80] sm:$0xff]
        %v203 = vld [vmem:[#allocation2 + $0x88] sm:$0xff]
        %v204 = vld [vmem:[#allocation2 + $0x90] sm:$0xff]
        %v205 = vld [vmem:[#allocation2 + $0x98] sm:$0xff]
        %v206 = vld [vmem:[#allocation2 + $0xa0] sm:$0xff]
        %v207 = vld [vmem:[#allocation2 + $0xa8] sm:$0xff]
        %v208 = vld [vmem:[#allocation2 + $0xb0] sm:$0xff]
        %v209 = vld [vmem:[#allocation2 + $0xb8] sm:$0xff]
        %v210 = vld [vmem:[#allocation2 + $0xc0] sm:$0xff]
        %v211 = vld [vmem:[#allocation2 + $0xc8] sm:$0xff]
        %v212 = vld [vmem:[#allocation2 + $0xd0] sm:$0xff]
        %v213 = vld [vmem:[#allocation2 + $0xd8] sm:$0xff]
        %v214 = vld [vmem:[#allocation2 + $0xe0] sm:$0xff]
        %v215 = vld [vmem:[#allocation2 + $0xe8] sm:$0xff]
        %v216 = vld [vmem:[#allocation2 + $0xf0] sm:$0xff]
        %v217 = vld [vmem:[#allocation2 + $0xf8] sm:$0xff]
        %v218 = vld [vmem:[#allocation2 + $0x100] sm:$0xff]
        %v219 = vld [vmem:[#allocation2 + $0x108] sm:$0xff]
        %v220 = vld [vmem:[#allocation2 + $0x110] sm:$0xff]
        %v221 = vld [vmem:[#allocation2 + $0x118] sm:$0xff]
        %v222 = vld [vmem:[#allocation2 + $0x120] sm:$0xff]
        %v223 = vld [vmem:[#allocation2 + $0x128] sm:$0xff]
        %v224 = vld [vmem:[#allocation2 + $0x130] sm:$0xff]
        %v225 = vld [vmem:[#allocation2 + $0x138] sm:$0xff]
        %v226 = vld [vmem:[#allocation2 + $0x140] sm:$0xff]
        %v227 = vld [vmem:[#allocation2 + $0x148] sm:$0xff]
        %v228 = vld [vmem:[#allocation2 + $0x150] sm:$0xff]
        %v229 = vld [vmem:[#allocation2 + $0x158] sm:$0xff]
        %v230 = vld [vmem:[#allocation2 + $0x160] sm:$0xff]
        %v231 = vld [vmem:[#allocation2 + $0x168] sm:$0xff]
        %v232 = vld [vmem:[#allocation2 + $0x170] sm:$0xff]
        %v233 = vld [vmem:[#allocation2 + $0x178] sm:$0xff]
        %v234 = vld [vmem:[#allocation2 + $0x180] sm:$0xff]
        %v235 = vld [vmem:[#allocation2 + $0x188] sm:$0xff]
        %v236 = vld [vmem:[#allocation2 + $0x190] sm:$0xff]
        %v237 = vld [vmem:[#allocation2 + $0x198] sm:$0xff]
        %v238 = vld [vmem:[#allocation2 + $0x1a0] sm:$0xff]
        %v239 = vld [vmem:[#allocation2 + $0x1a8] sm:$0xff]
        %v240 = vld [vmem:[#allocation2 + $0x1b0] sm:$0xff]
        %v241 = vld [vmem:[#allocation2 + $0x1b8] sm:$0xff]
        %v242 = vld [vmem:[#allocation2 + $0x1c0] sm:$0xff]
        %v243 = vld [vmem:[#allocation2 + $0x1c8] sm:$0xff]
        %v244 = vld [vmem:[#allocation2 + $0x1d0] sm:$0xff]
        %v245 = vld [vmem:[#allocation2 + $0x1d8] sm:$0xff]
        %v246 = vld [vmem:[#allocation2 + $0x1e0] sm:$0xff]
        %v247 = vld [vmem:[#allocation2 + $0x1e8] sm:$0xff]
        %v248 = vld [vmem:[#allocation2 + $0x1f0] sm:$0xff]
        %v249 = vld [vmem:[#allocation2 + $0x1f8] sm:$0xff]
        %v250 = vld [vmem:[#allocation2 + $0x200] sm:$0xff]
        %v251 = vld [vmem:[#allocation2 + $0x208] sm:$0xff]
        %v252 = vld [vmem:[#allocation2 + $0x210] sm:$0xff]
        %v253 = vld [vmem:[#allocation2 + $0x218] sm:$0xff]
        %v254 = vld [vmem:[#allocation2 + $0x220] sm:$0xff]
        %v255 = vld [vmem:[#allocation2 + $0x228] sm:$0xff]
        %v256 = vld [vmem:[#allocation2 + $0x230] sm:$0xff]
        %v257 = vld [vmem:[#allocation2 + $0x238] sm:$0xff]
        %v258 = vld [vmem:[#allocation2 + $0x240] sm:$0xff]
        %v259 = vld [vmem:[#allocation2 + $0x248] sm:$0xff]
        %v260 = vld [vmem:[#allocation2 + $0x250] sm:$0xff]
        %v261 = vld [vmem:[#allocation2 + $0x258] sm:$0xff]
        %v262 = vld [vmem:[#allocation2 + $0x260] sm:$0xff]
        %v263 = vld [vmem:[#allocation2 + $0x268] sm:$0xff]
        %v264 = vld [vmem:[#allocation2 + $0x270] sm:$0xff]
        %v265 = vld [vmem:[#allocation2 + $0x278] sm:$0xff]
        %v266 = vld [vmem:[#allocation2 + $0x280] sm:$0xff]
        %v267 = vld [vmem:[#allocation2 + $0x288] sm:$0xff]
        %v268 = vld [vmem:[#allocation2 + $0x290] sm:$0xff]
        %v269 = vld [vmem:[#allocation2 + $0x298] sm:$0xff]
        %v270 = vld [vmem:[#allocation2 + $0x2a0] sm:$0xff]
        %v271 = vld [vmem:[#allocation2 + $0x2a8] sm:$0xff]
        %v272 = vld [vmem:[#allocation2 + $0x2b0] sm:$0xff]
        %v273 = vld [vmem:[#allocation2 + $0x2b8] sm:$0xff]
        %v274 = vld [vmem:[#allocation2 + $0x2c0] sm:$0xff]
        %v275 = vld [vmem:[#allocation2 + $0x2c8] sm:$0xff]
        %v276 = vld [vmem:[#allocation2 + $0x2d0] sm:$0xff]
        %v277 = vld [vmem:[#allocation2 + $0x2d8] sm:$0xff]
        %v278 = vld [vmem:[#allocation2 + $0x2e0] sm:$0xff]
        %v279 = vld [vmem:[#allocation2 + $0x2e8] sm:$0xff]
        %v280 = vld [vmem:[#allocation2 + $0x2f0] sm:$0xff]
        %v281 = vld [vmem:[#allocation2 + $0x2f8] sm:$0xff]
        %282 = vmatprep.subr.mxu0 %v187
        %283 = vmatpush1.msra.mxu0 %v186
        %284 = vmatprep.subr.mxu0 %v193
        %285 = vmatpush1.msra.mxu0 %v192
        %286 = vmatprep.subr.mxu0 %v199
        %287 = vmatpush1.msra.mxu0 %v198
        %288 = vmatprep.subr.mxu0 %v205
        %289 = vmatpush1.msra.mxu0 %v204
        %290 = vmatprep.subr.mxu0 %v211
        %291 = vmatpush1.msra.mxu0 %v210
        %292 = vmatprep.subr.mxu0 %v217
        %293 = vmatpush1.msra.mxu0 %v216
        %294 = vmatprep.subr.mxu0 %v223
        %295 = vmatpush1.msra.mxu0 %v222
        %296 = vmatprep.subr.mxu0 %v229
        %297 = vmatpush1.msra.mxu0 %v228
        %298 = vmatprep.subr.mxu0 %v235
        %299 = vmatpush1.msra.mxu0 %v234
        %300 = vmatprep.subr.mxu0 %v241
        %301 = vmatpush1.msra.mxu0 %v240
        %302 = vmatprep.subr.mxu0 %v247
        %303 = vmatpush1.msra.mxu0 %v246
        %304 = vmatprep.subr.mxu0 %v253
        %305 = vmatpush1.msra.mxu0 %v252
        %306 = vmatprep.subr.mxu0 %v259
        %307 = vmatpush1.msra.mxu0 %v258
        %308 = vmatprep.subr.mxu0 %v265
        %309 = vmatpush1.msra.mxu0 %v264
        %310 = vmatprep.subr.mxu0 %v271
        %311 = vmatpush1.msra.mxu0 %v270
        %312 = vmatprep.subr.mxu0 %v277
        %313 = vmatpush1.msra.mxu0 %v276
        %314 = vmatprep.subr.mxu0 0.0
        %315 = vmatpush1.msra.mxu0 0.0
        %316 = vmatprep.subr.mxu0 0.0
        %317 = vmatpush1.msra.mxu0 0.0
        %318 = vmatprep.subr.mxu0 0.0
        %319 = vmatpush1.msra.mxu0 0.0
        %320 = vmatprep.subr.mxu0 0.0
        %321 = vmatpush1.msra.mxu0 0.0
        %322 = vmatprep.subr.mxu0 0.0
        %323 = vmatpush1.msra.mxu0 0.0
        %324 = vmatprep.subr.mxu0 0.0
        %325 = vmatpush1.msra.mxu0 0.0
        %326 = vmatprep.subr.mxu0 0.0
        %327 = vmatpush1.msra.mxu0 0.0
        %328 = vmatprep.subr.mxu0 0.0
        %329 = vmatpush1.msra.mxu0 0.0
        %330 = vmatprep.subr.mxu0 0.0
        %331 = vmatpush1.msra.mxu0 0.0
        %332 = vmatprep.subr.mxu0 0.0
        %333 = vmatpush1.msra.mxu0 0.0
        %334 = vmatprep.subr.mxu0 0.0
        %335 = vmatpush1.msra.mxu0 0.0
        %336 = vmatprep.subr.mxu0 0.0
        %337 = vmatpush1.msra.mxu0 0.0
        %338 = vmatprep.subr.mxu0 0.0
        %339 = vmatpush1.msra.mxu0 0.0
        %340 = vmatprep.subr.mxu0 0.0
        %341 = vmatpush1.msra.mxu0 0.0
        %342 = vmatprep.subr.mxu0 0.0
        %343 = vmatpush1.msra.mxu0 0.0
        %344 = vmatprep.subr.mxu0 0.0
        %345 = vmatpush1.msra.mxu0 0.0
        %346 = vmatprep.mubr.f32.mxu0 0.0
        %347 = vmatmul.mubr.f32.gmra.mrb[0].mxu0 %v184
        %v348 = vpop.f32.mrb[0].mxu0
        %v349 = vadd.f32 0.0, %v348
        %v350 = vpop.f32.mrb[0].mxu0
        %v351 = vadd.f32 0.0, %v350
        %352 = vmatprep.mubr.f32.mxu0 0.0
        %353 = vmatmul.mubr.f32.gmra.mrb[0].mxu0 %v185
        %v354 = vpop.f32.mrb[0].mxu0
        %v355 = vadd.f32 0.0, %v354
        %v356 = vpop.f32.mrb[0].mxu0
        %v357 = vadd.f32 0.0, %v356
        %358 = vdwg.mxu0
        %359 = vmatprep.subr.mxu0 %v189
        %360 = vmatpush1.msra.mxu0 %v188
        %361 = vmatprep.subr.mxu0 %v195
        %362 = vmatpush1.msra.mxu0 %v194
        %363 = vmatprep.subr.mxu0 %v201
        %364 = vmatpush1.msra.mxu0 %v200
        %365 = vmatprep.subr.mxu0 %v207
        %366 = vmatpush1.msra.mxu0 %v206
        %367 = vmatprep.subr.mxu0 %v213
        %368 = vmatpush1.msra.mxu0 %v212
        %369 = vmatprep.subr.mxu0 %v219
        %370 = vmatpush1.msra.mxu0 %v218
        %371 = vmatprep.subr.mxu0 %v225
        %372 = vmatpush1.msra.mxu0 %v224
        %373 = vmatprep.subr.mxu0 %v231
        %374 = vmatpush1.msra.mxu0 %v230
        %375 = vmatprep.subr.mxu0 %v237
        %376 = vmatpush1.msra.mxu0 %v236
        %377 = vmatprep.subr.mxu0 %v243
        %378 = vmatpush1.msra.mxu0 %v242
        %379 = vmatprep.subr.mxu0 %v249
        %380 = vmatpush1.msra.mxu0 %v248
        %381 = vmatprep.subr.mxu0 %v255
        %382 = vmatpush1.msra.mxu0 %v254
        %383 = vmatprep.subr.mxu0 %v261
        %384 = vmatpush1.msra.mxu0 %v260
        %385 = vmatprep.subr.mxu0 %v267
        %386 = vmatpush1.msra.mxu0 %v266
        %387 = vmatprep.subr.mxu0 %v273
        %388 = vmatpush1.msra.mxu0 %v272
        %389 = vmatprep.subr.mxu0 %v279
        %390 = vmatpush1.msra.mxu0 %v278
        %391 = vmatprep.subr.mxu0 0.0
        %392 = vmatpush1.msra.mxu0 0.0
        %393 = vmatprep.subr.mxu0 0.0
        %394 = vmatpush1.msra.mxu0 0.0
        %395 = vmatprep.subr.mxu0 0.0
        %396 = vmatpush1.msra.mxu0 0.0
        %397 = vmatprep.subr.mxu0 0.0
        %398 = vmatpush1.msra.mxu0 0.0
        %399 = vmatprep.subr.mxu0 0.0
        %400 = vmatpush1.msra.mxu0 0.0
        %401 = vmatprep.subr.mxu0 0.0
        %402 = vmatpush1.msra.mxu0 0.0
        %403 = vmatprep.subr.mxu0 0.0
        %404 = vmatpush1.msra.mxu0 0.0
        %405 = vmatprep.subr.mxu0 0.0
        %406 = vmatpush1.msra.mxu0 0.0
        %407 = vmatprep.subr.mxu0 0.0
        %408 = vmatpush1.msra.mxu0 0.0
        %409 = vmatprep.subr.mxu0 0.0
        %410 = vmatpush1.msra.mxu0 0.0
        %411 = vmatprep.subr.mxu0 0.0
        %412 = vmatpush1.msra.mxu0 0.0
        %413 = vmatprep.subr.mxu0 0.0
        %414 = vmatpush1.msra.mxu0 0.0
        %415 = vmatprep.subr.mxu0 0.0
        %416 = vmatpush1.msra.mxu0 0.0
        %417 = vmatprep.subr.mxu0 0.0
        %418 = vmatpush1.msra.mxu0 0.0
        %419 = vmatprep.subr.mxu0 0.0
        %420 = vmatpush1.msra.mxu0 0.0
        %421 = vmatprep.subr.mxu0 0.0
        %422 = vmatpush1.msra.mxu0 0.0
        %423 = vmatprep.mubr.f32.mxu0 0.0
        %424 = vmatmul.mubr.f32.gmra.mrb[0].mxu0 %v184
        %v425 = vpop.f32.mrb[0].mxu0
        %v426 = vadd.f32 0.0, %v425
        %v427 = vpop.f32.mrb[0].mxu0
        %v428 = vadd.f32 0.0, %v427
        %429 = vmatprep.mubr.f32.mxu0 0.0
        %430 = vmatmul.mubr.f32.gmra.mrb[0].mxu0 %v185
        %v431 = vpop.f32.mrb[0].mxu0
        %v432 = vadd.f32 0.0, %v431
        %v433 = vpop.f32.mrb[0].mxu0
        %v434 = vadd.f32 0.0, %v433
        %435 = vdwg.mxu0
        %436 = vmatprep.subr.mxu0 %v191
        %437 = vmatpush1.msra.mxu0 %v190
        %438 = vmatprep.subr.mxu0 %v197
        %439 = vmatpush1.msra.mxu0 %v196
        %440 = vmatprep.subr.mxu0 %v203
        %441 = vmatpush1.msra.mxu0 %v202
        %442 = vmatprep.subr.mxu0 %v209
        %443 = vmatpush1.msra.mxu0 %v208
        %444 = vmatprep.subr.mxu0 %v215
        %445 = vmatpush1.msra.mxu0 %v214
        %446 = vmatprep.subr.mxu0 %v221
        %447 = vmatpush1.msra.mxu0 %v220
        %448 = vmatprep.subr.mxu0 %v227
        %449 = vmatpush1.msra.mxu0 %v226
        %450 = vmatprep.subr.mxu0 %v233
        %451 = vmatpush1.msra.mxu0 %v232
        %452 = vmatprep.subr.mxu0 %v239
        %453 = vmatpush1.msra.mxu0 %v238
        %454 = vmatprep.subr.mxu0 %v245
        %455 = vmatpush1.msra.mxu0 %v244
        %456 = vmatprep.subr.mxu0 %v251
        %457 = vmatpush1.msra.mxu0 %v250
        %458 = vmatprep.subr.mxu0 %v257
        %459 = vmatpush1.msra.mxu0 %v256
        %460 = vmatprep.subr.mxu0 %v263
        %461 = vmatpush1.msra.mxu0 %v262
        %462 = vmatprep.subr.mxu0 %v269
        %463 = vmatpush1.msra.mxu0 %v268
        %464 = vmatprep.subr.mxu0 %v275
        %465 = vmatpush1.msra.mxu0 %v274
        %466 = vmatprep.subr.mxu0 %v281
        %467 = vmatpush1.msra.mxu0 %v280
        %468 = vmatprep.subr.mxu0 0.0
        %469 = vmatpush1.msra.mxu0 0.0
        %470 = vmatprep.subr.mxu0 0.0
        %471 = vmatpush1.msra.mxu0 0.0
        %472 = vmatprep.subr.mxu0 0.0
        %473 = vmatpush1.msra.mxu0 0.0
        %474 = vmatprep.subr.mxu0 0.0
        %475 = vmatpush1.msra.mxu0 0.0
        %476 = vmatprep.subr.mxu0 0.0
        %477 = vmatpush1.msra.mxu0 0.0
        %478 = vmatprep.subr.mxu0 0.0
        %479 = vmatpush1.msra.mxu0 0.0
        %480 = vmatprep.subr.mxu0 0.0
        %481 = vmatpush1.msra.mxu0 0.0
        %482 = vmatprep.subr.mxu0 0.0
        %483 = vmatpush1.msra.mxu0 0.0
        %484 = vmatprep.subr.mxu0 0.0
        %485 = vmatpush1.msra.mxu0 0.0
        %486 = vmatprep.subr.mxu0 0.0
        %487 = vmatpush1.msra.mxu0 0.0
        %488 = vmatprep.subr.mxu0 0.0
        %489 = vmatpush1.msra.mxu0 0.0
        %490 = vmatprep.subr.mxu0 0.0
        %491 = vmatpush1.msra.mxu0 0.0
        %492 = vmatprep.subr.mxu0 0.0
        %493 = vmatpush1.msra.mxu0 0.0
        %494 = vmatprep.subr.mxu0 0.0
        %495 = vmatpush1.msra.mxu0 0.0
        %496 = vmatprep.subr.mxu0 0.0
        %497 = vmatpush1.msra.mxu0 0.0
        %498 = vmatprep.subr.mxu0 0.0
        %499 = vmatpush1.msra.mxu0 0.0
        %500 = vmatprep.mubr.f32.mxu0 0.0
        %501 = vmatmul.mubr.f32.gmra.mrb[0].mxu0 %v184
        %v502 = vpop.f32.mrb[0].mxu0
        %v503 = vadd.f32 0.0, %v502
        %v504 = vpop.f32.mrb[0].mxu0
        %v505 = vadd.f32 0.0, %v504
        %506 = vmatprep.mubr.f32.mxu0 0.0
        %507 = vmatmul.mubr.f32.gmra.mrb[0].mxu0 %v185
        %v508 = vpop.f32.mrb[0].mxu0
        %v509 = vadd.f32 0.0, %v508
        %v510 = vpop.f32.mrb[0].mxu0
        %v511 = vadd.f32 0.0, %v510
        %512 = vdwg.mxu0
        %vm517 = vcmask 1040384
        %v518 = vrot.slane %v349, 7
        %v519 = vrot.slane %v351, 7
        %v520 = vrot.slane %v355, 7
        %v521 = vsel %vm517, %v518, %v520
        %v522 = vrot.slane %v357, 7
        %v523 = vsel %vm517, %v519, %v522
        %v528 = vsel %vm517, 0.0, %v518
        %v529 = vsel %vm517, 0.0, %v519
        %v530 = vadd.f32 %v426, %v528
        %v531 = vadd.f32 %v428, %v529
        %v532 = vadd.f32 %v432, %v521
        %v533 = vadd.f32 %v434, %v523
        %vm538 = vcmask 1046528
        %v539 = vrot.slane %v503, 1
        %v540 = vrot.slane %v509, 1
        %v541 = vsel %vm538, %v539, %v540
        %v542 = vrot.slane %v505, 1
        %v543 = vrot.slane %v511, 1
        %v544 = vsel %vm538, %v542, %v543
        %v549 = vsel %vm538, %v540, 0.0
        %v550 = vsel %vm538, %v543, 0.0
        %v551 = vadd.f32 %v530, %v541
        %v552 = vadd.f32 %v531, %v544
        %v553 = vadd.f32 %v532, %v549
        %v554 = vadd.f32 %v533, %v550
        %v555 = vld [vmem:[%s2] sm:$0x3]
        %v557 = vlaneseq
        %v558 = vshrl.u32 %v557, 7
        %v559 = vsub.s32 0, %v558
        %v560 = vrot.slane %v555, %v559
        %v561 = vlaneseq
        %v562 = vshrl.u32 %v561, 7
        %v563 = vsub.s32 1, %v562
        %v564 = vrot.slane %v555, %v563
        %v567 = vadd.f32 %v551, %v560
        %v568 = vadd.f32 %v552, %v564
        %v569 = vadd.f32 %v553, %v560
        %v570 = vadd.f32 %v554, %v564
        %v571 = vmax.f32 %v567, 0.0
        %v572 = vmax.f32 %v568, 0.0
        %v573 = vmax.f32 %v569, 0.0
        %v574 = vmax.f32 %v570, 0.0
        %v575 = vmax.f32 %v571, %v572
        %v576 = vmax.f32 %v573, %v574
        %v579 = vcombine.high %v575, %v575
        %v581 = vunpack.c.l.s4 1983009808
        %v582 = vunpack.c.0.s8 %v581
        %v583 = vlaneseq
        %v584 = vshrl.u32 %v583, 7
        %v585 = vsub.s32 %v582, %v584
        %v586 = vrot.slane %v575, %v585
        %v588 = vunpack.c.l.s4 1983009808
        %v589 = vunpack.c.0.s8 %v588
        %v590 = vlaneseq
        %v591 = vshrl.u32 %v590, 7
        %v592 = vsub.s32 %v589, %v591
        %v593 = vrot.slane %v579, %v592
        %v594 = vcombine.high %v586, %v586
        %v595 = vcombine.high %v593, %v593
        %v596 = vcombine.high %v576, %v576
        %v598 = vunpack.c.l.s4 1983009808
        %v599 = vunpack.c.0.s8 %v598
        %v600 = vlaneseq
        %v601 = vshrl.u32 %v600, 7
        %v602 = vsub.s32 %v599, %v601
        %v603 = vrot.slane %v576, %v602
        %v605 = vunpack.c.l.s4 1983009808
        %v606 = vunpack.c.0.s8 %v605
        %v607 = vlaneseq
        %v608 = vshrl.u32 %v607, 7
        %v609 = vsub.s32 %v606, %v608
        %v610 = vrot.slane %v596, %v609
        %v611 = vcombine.high %v603, %v603
        %v612 = vcombine.high %v610, %v610
        %v621 = vrot.slane %v586, 7
        %v622 = vrot.slane %v621, 2
        %v623 = vrot.slane %v594, 7
        %v624 = vrot.slane %v623, 2
        %v625 = vrot.slane %v593, 7
        %v626 = vrot.slane %v625, 2
        %v627 = vrot.slane %v595, 7
        %v628 = vrot.slane %v627, 2
        %v629 = vrot.slane %v603, 7
        %v630 = vrot.slane %v629, 2
        %v631 = vrot.slane %v611, 7
        %v632 = vrot.slane %v631, 2
        %v633 = vrot.slane %v610, 7
        %v634 = vrot.slane %v633, 2
        %v635 = vrot.slane %v612, 7
        %v636 = vrot.slane %v635, 2
        %v645 = vmax.f32 %v586, %v622
        %v646 = vmax.f32 %v594, %v624
        %v647 = vmax.f32 %v593, %v626
        %v648 = vmax.f32 %v595, %v628
        %v649 = vmax.f32 %v603, %v630
        %v650 = vmax.f32 %v611, %v632
        %v651 = vmax.f32 %v610, %v634
        %v652 = vmax.f32 %v612, %v636
        %v661 = vlaneseq
        %v662 = vshrl.u32 %v661, 7
        %v663 = vsub.s32 0, %v662
        %v664 = vrot.slane %v645, %v663
        %v665 = vlaneseq
        %v666 = vshrl.u32 %v665, 7
        %v667 = vsub.s32 0, %v666
        %v668 = vrot.slane %v646, %v667
        %v669 = vlaneseq
        %v670 = vshrl.u32 %v669, 7
        %v671 = vsub.s32 0, %v670
        %v672 = vrot.slane %v647, %v671
        %v673 = vlaneseq
        %v674 = vshrl.u32 %v673, 7
        %v675 = vsub.s32 0, %v674
        %v676 = vrot.slane %v648, %v675
        %v677 = vlaneseq
        %v678 = vshrl.u32 %v677, 7
        %v679 = vsub.s32 0, %v678
        %v680 = vrot.slane %v649, %v679
        %v681 = vlaneseq
        %v682 = vshrl.u32 %v681, 7
        %v683 = vsub.s32 0, %v682
        %v684 = vrot.slane %v650, %v683
        %v685 = vlaneseq
        %v686 = vshrl.u32 %v685, 7
        %v687 = vsub.s32 0, %v686
        %v688 = vrot.slane %v651, %v687
        %v689 = vlaneseq
        %v690 = vshrl.u32 %v689, 7
        %v691 = vsub.s32 0, %v690
        %v692 = vrot.slane %v652, %v691
        %vm693 = vcmask 1041409
        %v694 = vsel %vm693, %v668, %v664
        %vm695 = vcmask 1042434
        %v696 = vsel %vm695, %v672, %v694
        %vm697 = vcmask 1043459
        %v698 = vsel %vm697, %v676, %v696
        %vm699 = vcmask 1044484
        %v700 = vsel %vm699, %v680, %v698
        %vm701 = vcmask 1045509
        %v702 = vsel %vm701, %v684, %v700
        %vm703 = vcmask 1046534
        %v704 = vsel %vm703, %v688, %v702
        %vm705 = vcmask 1047559
        %v706 = vsel %vm705, %v692, %v704
        %708 = vst [vmem:[%s183] sm:$0xff] %v706
        %p709 = scmp.lt.s32.totalorder %s15, 1
        %s710 = scalar_select %p709, %s15, 1
        %s711 = smul.addr %s710, 8
        %s712 = scalar_lea.vmem %s3, %s711
        // Predicated region
        $region37: #{_lambda_.4} parent=31 // pred_check
          %p713 = pneg %p101
        $region38: #{_lambda_.4} parent=31 // pred_check_branch
          %715 = sbr.rel (%p713) target = $region40
        $region39: #{_lambda_.4} parent=31 // pred_region
          _
        $region40: #{_lambda_.4} parent=31 // pred_fallthru
          _
      $region32: #{_lambda_.4} parent=5 // pred_fallthru
        _
      %p716 = scmp.le.s32.totalorder 2, %s10
      // Predicated region
      $region41: #{_lambda_.4} parent=5 // pred_check
        %p717 = pneg %p716
      $region42: #{_lambda_.4} parent=5 // pred_check_branch
        %719 = sbr.rel (%p717) target = $region44
      $region43: #{_lambda_.4} parent=5 // pred_region
        %s720 = ssub.s32 %s10, 2
        // Predicated region
        $region45: #{_lambda_.4} parent=43 // pred_check
          %p721 = pneg %p107
        $region46: #{_lambda_.4} parent=43 // pred_check_branch
          %723 = sbr.rel (%p721) target = $region48
        $region47: #{_lambda_.4} parent=43 // pred_region
          %p724 = scmp.lt.s32.totalorder %s16, 1
          %s725 = scalar_select %p724, %s16, 1
          %s726 = smul.addr %s725, 8
          %s727 = scalar_lea.vmem %s3, %s726
        $region48: #{_lambda_.4} parent=43 // pred_fallthru
          _
      $region44: #{_lambda_.4} parent=5 // pred_fallthru
        _
    $region6: #{_lambda_.4} parent=1 // loop_footer
      %s14 = sadd.s32 1, %s10
    $region7: #{_lambda_.4} parent=1 // loop_footer_branch
      %9 = sbr.rel target = $region3
    $region8: #{_lambda_.4} parent=1 // loop_exit
      _
    %728 = vsyncpa [#allocation3], 1
    %s729 = scalar_lea.sflag [#allocation3], 1
    %730 = vsyncpa %s729, 1

// kernel: _lambda_.5
$region0: #{_lambda_.5}
  #allocation0 [shape = 'u32[]', space=smem, size = 0x4, offset = 0x4, fixed_abs, tag = 'smem constant byte address 0x4 - core index']
  #allocation1 [shape = 'u32[144,128]{1,0:T(1,128)}', space=vmem, size = 0x12000, scoped, tag = 'internal scratch']
  %s0 = inlined_call_operand.vmem [shape: f32[2,1024], index: 0, kind: input, shape index: {}]
  %s1 = inlined_call_operand.vmem [shape: f32[1024,32], index: 1, kind: input, shape index: {}]
  %s2 = inlined_call_operand.vmem [shape: f32[1,32], index: 2, kind: input, shape index: {}]
  %s3 = inlined_call_operand.vmem [shape: f32[32,10], index: 3, kind: input, shape index: {}]
  %s4 = inlined_call_operand.vmem [shape: f32[1,10], index: 4, kind: input, shape index: {}]
  %s5 = inlined_call_operand.hbm [shape: f32[2,10], index: 5, kind: output, shape index: {}]
  %s6 = sld [smem:[#allocation0]]
  $region30: #{_lambda_.5} parent=0
    _
  %s8 = ssub.s32 1, %s6
  %s9 = scalar_select 0, %s8, %s6
  $region1: #{_lambda_.5} parent=0
    #allocation2 [shape = 'u8[1024]{0}', space=vmem, size = 0x400, scoped, tag = 'output window, operand 0, single buffered']
    #allocation3 [shape = 's32[1]{0}', space=sflag, size = 0x4, scoped, tag = 'scoped memory for _lambda_.5']
    %10 = vsyncpa [#allocation3], 0
    // Predicated region
    $region2: #{_lambda_.5} parent=1 // pred_check
      _
    $region3: #{_lambda_.5} parent=1 // pred_check_branch
      %12 = sbr.rel (0) target = $region5
    $region4: #{_lambda_.5} parent=1 // pred_region
      _
    $region5: #{_lambda_.5} parent=1 // pred_fallthru
      _
    // Predicated region
    $region6: #{_lambda_.5} parent=1 // pred_check
      _
    $region7: #{_lambda_.5} parent=1 // pred_check_branch
      %14 = sbr.rel (0) target = $region9
    $region8: #{_lambda_.5} parent=1 // pred_region
      _
    $region9: #{_lambda_.5} parent=1 // pred_fallthru
      _
    // Predicated region
    $region10: #{_lambda_.5} parent=1 // pred_check
      _
    $region11: #{_lambda_.5} parent=1 // pred_check_branch
      %16 = sbr.rel (0) target = $region13
    $region12: #{_lambda_.5} parent=1 // pred_region
      _
    $region13: #{_lambda_.5} parent=1 // pred_fallthru
      _
    // Predicated region
    $region14: #{_lambda_.5} parent=1 // pred_check
      _
    $region15: #{_lambda_.5} parent=1 // pred_check_branch
      %18 = sbr.rel (0) target = $region17
    $region16: #{_lambda_.5} parent=1 // pred_region
      _
    $region17: #{_lambda_.5} parent=1 // pred_fallthru
      _
    // Predicated region
    $region18: #{_lambda_.5} parent=1 // pred_check
      _
    $region19: #{_lambda_.5} parent=1 // pred_check_branch
      %20 = sbr.rel (0) target = $region21
    $region20: #{_lambda_.5} parent=1 // pred_region
      _
    $region21: #{_lambda_.5} parent=1 // pred_fallthru
      _
    %v21 = vld [vmem:[%s0] sm:$0xff]
    %v22 = vld [vmem:[%s0 + $0x8] sm:$0xff]
    %v23 = vld [vmem:[%s1] sm:$0xff]
    %v24 = vld [vmem:[%s1 + $0x8] sm:$0xff]
    %v25 = vld [vmem:[%s1 + $0x10] sm:$0xff]
    %v26 = vld [vmem:[%s1 + $0x18] sm:$0xff]
    %v27 = vld [vmem:[%s1 + $0x20] sm:$0xff]
    %v28 = vld [vmem:[%s1 + $0x28] sm:$0xff]
    %v29 = vld [vmem:[%s1 + $0x30] sm:$0xff]
    %v30 = vld [vmem:[%s1 + $0x38] sm:$0xff]
    %v31 = vld [vmem:[%s1 + $0x40] sm:$0xff]
    %v32 = vld [vmem:[%s1 + $0x48] sm:$0xff]
    %v33 = vld [vmem:[%s1 + $0x50] sm:$0xff]
    %v34 = vld [vmem:[%s1 + $0x58] sm:$0xff]
    %v35 = vld [vmem:[%s1 + $0x60] sm:$0xff]
    %v36 = vld [vmem:[%s1 + $0x68] sm:$0xff]
    %v37 = vld [vmem:[%s1 + $0x70] sm:$0xff]
    %v38 = vld [vmem:[%s1 + $0x78] sm:$0xff]
    %v39 = vld [vmem:[%s1 + $0x80] sm:$0xff]
    %v40 = vld [vmem:[%s1 + $0x88] sm:$0xff]
    %v41 = vld [vmem:[%s1 + $0x90] sm:$0xff]
    %v42 = vld [vmem:[%s1 + $0x98] sm:$0xff]
    %v43 = vld [vmem:[%s1 + $0xa0] sm:$0xff]
    %v44 = vld [vmem:[%s1 + $0xa8] sm:$0xff]
    %v45 = vld [vmem:[%s1 + $0xb0] sm:$0xff]
    %v46 = vld [vmem:[%s1 + $0xb8] sm:$0xff]
    %v47 = vld [vmem:[%s1 + $0xc0] sm:$0xff]
    %v48 = vld [vmem:[%s1 + $0xc8] sm:$0xff]
    %v49 = vld [vmem:[%s1 + $0xd0] sm:$0xff]
    %v50 = vld [vmem:[%s1 + $0xd8] sm:$0xff]
    %v51 = vld [vmem:[%s1 + $0xe0] sm:$0xff]
    %v52 = vld [vmem:[%s1 + $0xe8] sm:$0xff]
    %v53 = vld [vmem:[%s1 + $0xf0] sm:$0xff]
    %v54 = vld [vmem:[%s1 + $0xf8] sm:$0xff]
    %v55 = vld [vmem:[%s1 + $0x100] sm:$0xff]
    %v56 = vld [vmem:[%s1 + $0x108] sm:$0xff]
    %v57 = vld [vmem:[%s1 + $0x110] sm:$0xff]
    %v58 = vld [vmem:[%s1 + $0x118] sm:$0xff]
    %v59 = vld [vmem:[%s1 + $0x120] sm:$0xff]
    %v60 = vld [vmem:[%s1 + $0x128] sm:$0xff]
    %v61 = vld [vmem:[%s1 + $0x130] sm:$0xff]
    %v62 = vld [vmem:[%s1 + $0x138] sm:$0xff]
    %v63 = vld [vmem:[%s1 + $0x140] sm:$0xff]
    %v64 = vld [vmem:[%s1 + $0x148] sm:$0xff]
    %v65 = vld [vmem:[%s1 + $0x150] sm:$0xff]
    %v66 = vld [vmem:[%s1 + $0x158] sm:$0xff]
    %v67 = vld [vmem:[%s1 + $0x160] sm:$0xff]
    %v68 = vld [vmem:[%s1 + $0x168] sm:$0xff]
    %v69 = vld [vmem:[%s1 + $0x170] sm:$0xff]
    %v70 = vld [vmem:[%s1 + $0x178] sm:$0xff]
    %v71 = vld [vmem:[%s1 + $0x180] sm:$0xff]
    %v72 = vld [vmem:[%s1 + $0x188] sm:$0xff]
    %v73 = vld [vmem:[%s1 + $0x190] sm:$0xff]
    %v74 = vld [vmem:[%s1 + $0x198] sm:$0xff]
    %v75 = vld [vmem:[%s1 + $0x1a0] sm:$0xff]
    %v76 = vld [vmem:[%s1 + $0x1a8] sm:$0xff]
    %v77 = vld [vmem:[%s1 + $0x1b0] sm:$0xff]
    %v78 = vld [vmem:[%s1 + $0x1b8] sm:$0xff]
    %v79 = vld [vmem:[%s1 + $0x1c0] sm:$0xff]
    %v80 = vld [vmem:[%s1 + $0x1c8] sm:$0xff]
    %v81 = vld [vmem:[%s1 + $0x1d0] sm:$0xff]
    %v82 = vld [vmem:[%s1 + $0x1d8] sm:$0xff]
    %v83 = vld [vmem:[%s1 + $0x1e0] sm:$0xff]
    %v84 = vld [vmem:[%s1 + $0x1e8] sm:$0xff]
    %v85 = vld [vmem:[%s1 + $0x1f0] sm:$0xff]
    %v86 = vld [vmem:[%s1 + $0x1f8] sm:$0xff]
    %v87 = vld [vmem:[%s1 + $0x200] sm:$0xff]
    %v88 = vld [vmem:[%s1 + $0x208] sm:$0xff]
    %v89 = vld [vmem:[%s1 + $0x210] sm:$0xff]
    %v90 = vld [vmem:[%s1 + $0x218] sm:$0xff]
    %v91 = vld [vmem:[%s1 + $0x220] sm:$0xff]
    %v92 = vld [vmem:[%s1 + $0x228] sm:$0xff]
    %v93 = vld [vmem:[%s1 + $0x230] sm:$0xff]
    %v94 = vld [vmem:[%s1 + $0x238] sm:$0xff]
    %v95 = vld [vmem:[%s1 + $0x240] sm:$0xff]
    %v96 = vld [vmem:[%s1 + $0x248] sm:$0xff]
    %v97 = vld [vmem:[%s1 + $0x250] sm:$0xff]
    %v98 = vld [vmem:[%s1 + $0x258] sm:$0xff]
    %v99 = vld [vmem:[%s1 + $0x260] sm:$0xff]
    %v100 = vld [vmem:[%s1 + $0x268] sm:$0xff]
    %v101 = vld [vmem:[%s1 + $0x270] sm:$0xff]
    %v102 = vld [vmem:[%s1 + $0x278] sm:$0xff]
    %v103 = vld [vmem:[%s1 + $0x280] sm:$0xff]
    %v104 = vld [vmem:[%s1 + $0x288] sm:$0xff]
    %v105 = vld [vmem:[%s1 + $0x290] sm:$0xff]
    %v106 = vld [vmem:[%s1 + $0x298] sm:$0xff]
    %v107 = vld [vmem:[%s1 + $0x2a0] sm:$0xff]
    %v108 = vld [vmem:[%s1 + $0x2a8] sm:$0xff]
    %v109 = vld [vmem:[%s1 + $0x2b0] sm:$0xff]
    %v110 = vld [vmem:[%s1 + $0x2b8] sm:$0xff]
    %v111 = vld [vmem:[%s1 + $0x2c0] sm:$0xff]
    %v112 = vld [vmem:[%s1 + $0x2c8] sm:$0xff]
    %v113 = vld [vmem:[%s1 + $0x2d0] sm:$0xff]
    %v114 = vld [vmem:[%s1 + $0x2d8] sm:$0xff]
    %v115 = vld [vmem:[%s1 + $0x2e0] sm:$0xff]
    %v116 = vld [vmem:[%s1 + $0x2e8] sm:$0xff]
    %v117 = vld [vmem:[%s1 + $0x2f0] sm:$0xff]
    %v118 = vld [vmem:[%s1 + $0x2f8] sm:$0xff]
    %v119 = vld [vmem:[%s1 + $0x300] sm:$0xff]
    %v120 = vld [vmem:[%s1 + $0x308] sm:$0xff]
    %v121 = vld [vmem:[%s1 + $0x310] sm:$0xff]
    %v122 = vld [vmem:[%s1 + $0x318] sm:$0xff]
    %v123 = vld [vmem:[%s1 + $0x320] sm:$0xff]
    %v124 = vld [vmem:[%s1 + $0x328] sm:$0xff]
    %v125 = vld [vmem:[%s1 + $0x330] sm:$0xff]
    %v126 = vld [vmem:[%s1 + $0x338] sm:$0xff]
    %v127 = vld [vmem:[%s1 + $0x340] sm:$0xff]
    %v128 = vld [vmem:[%s1 + $0x348] sm:$0xff]
    %v129 = vld [vmem:[%s1 + $0x350] sm:$0xff]
    %v130 = vld [vmem:[%s1 + $0x358] sm:$0xff]
    %v131 = vld [vmem:[%s1 + $0x360] sm:$0xff]
    %v132 = vld [vmem:[%s1 + $0x368] sm:$0xff]
    %v133 = vld [vmem:[%s1 + $0x370] sm:$0xff]
    %v134 = vld [vmem:[%s1 + $0x378] sm:$0xff]
    %v135 = vld [vmem:[%s1 + $0x380] sm:$0xff]
    %v136 = vld [vmem:[%s1 + $0x388] sm:$0xff]
    %v137 = vld [vmem:[%s1 + $0x390] sm:$0xff]
    %v138 = vld [vmem:[%s1 + $0x398] sm:$0xff]
    %v139 = vld [vmem:[%s1 + $0x3a0] sm:$0xff]
    %v140 = vld [vmem:[%s1 + $0x3a8] sm:$0xff]
    %v141 = vld [vmem:[%s1 + $0x3b0] sm:$0xff]
    %v142 = vld [vmem:[%s1 + $0x3b8] sm:$0xff]
    %v143 = vld [vmem:[%s1 + $0x3c0] sm:$0xff]
    %v144 = vld [vmem:[%s1 + $0x3c8] sm:$0xff]
    %v145 = vld [vmem:[%s1 + $0x3d0] sm:$0xff]
    %v146 = vld [vmem:[%s1 + $0x3d8] sm:$0xff]
    %v147 = vld [vmem:[%s1 + $0x3e0] sm:$0xff]
    %v148 = vld [vmem:[%s1 + $0x3e8] sm:$0xff]
    %v149 = vld [vmem:[%s1 + $0x3f0] sm:$0xff]
    %v150 = vld [vmem:[%s1 + $0x3f8] sm:$0xff]
    %v151 = vld [vmem:[%s2] sm:$0x1]
    %v153 = vlaneseq
    %v154 = vshrl.u32 %v153, 7
    %v155 = vsub.s32 0, %v154
    %v156 = vrot.slane %v151, %v155
    %v160 = vcombine.high %v21, %v21
    %v162 = vunpack.c.l.s4 1983009808
    %v163 = vunpack.c.0.s8 %v162
    %v164 = vlaneseq
    %v165 = vshrl.u32 %v164, 7
    %v166 = vsub.s32 %v163, %v165
    %v167 = vrot.slane %v21, %v166
    %v169 = vunpack.c.l.s4 1983009808
    %v170 = vunpack.c.0.s8 %v169
    %v171 = vlaneseq
    %v172 = vshrl.u32 %v171, 7
    %v173 = vsub.s32 %v170, %v172
    %v174 = vrot.slane %v160, %v173
    %v175 = vcombine.high %v167, %v167
    %v176 = vcombine.high %v174, %v174
    %v177 = vcombine.high %v22, %v22
    %v179 = vunpack.c.l.s4 1983009808
    %v180 = vunpack.c.0.s8 %v179
    %v181 = vlaneseq
    %v182 = vshrl.u32 %v181, 7
    %v183 = vsub.s32 %v180, %v182
    %v184 = vrot.slane %v22, %v183
    %v186 = vunpack.c.l.s4 1983009808
    %v187 = vunpack.c.0.s8 %v186
    %v188 = vlaneseq
    %v189 = vshrl.u32 %v188, 7
    %v190 = vsub.s32 %v187, %v189
    %v191 = vrot.slane %v177, %v190
    %v192 = vcombine.high %v184, %v184
    %v193 = vcombine.high %v191, %v191
    %202 = vmatprep.subr.mxu0 0.0
    %203 = vmatpush1.msra.mxu0 %v23
    %204 = vmatprep.subr.mxu0 0.0
    %205 = vmatpush1.msra.mxu0 %v24
    %206 = vmatprep.subr.mxu0 0.0
    %207 = vmatpush1.msra.mxu0 %v25
    %208 = vmatprep.subr.mxu0 0.0
    %209 = vmatpush1.msra.mxu0 %v26
    %210 = vmatprep.subr.mxu0 0.0
    %211 = vmatpush1.msra.mxu0 %v27
    %212 = vmatprep.subr.mxu0 0.0
    %213 = vmatpush1.msra.mxu0 %v28
    %214 = vmatprep.subr.mxu0 0.0
    %215 = vmatpush1.msra.mxu0 %v29
    %216 = vmatprep.subr.mxu0 0.0
    %217 = vmatpush1.msra.mxu0 %v30
    %218 = vmatprep.subr.mxu0 0.0
    %219 = vmatpush1.msra.mxu0 %v31
    %220 = vmatprep.subr.mxu0 0.0
    %221 = vmatpush1.msra.mxu0 %v32
    %222 = vmatprep.subr.mxu0 0.0
    %223 = vmatpush1.msra.mxu0 %v33
    %224 = vmatprep.subr.mxu0 0.0
    %225 = vmatpush1.msra.mxu0 %v34
    %226 = vmatprep.subr.mxu0 0.0
    %227 = vmatpush1.msra.mxu0 %v35
    %228 = vmatprep.subr.mxu0 0.0
    %229 = vmatpush1.msra.mxu0 %v36
    %230 = vmatprep.subr.mxu0 0.0
    %231 = vmatpush1.msra.mxu0 %v37
    %232 = vmatprep.subr.mxu0 0.0
    %233 = vmatpush1.msra.mxu0 %v38
    %234 = vmatprep.subr.mxu0 0.0
    %235 = vmatpush1.msra.mxu0 %v39
    %236 = vmatprep.subr.mxu0 0.0
    %237 = vmatpush1.msra.mxu0 %v40
    %238 = vmatprep.subr.mxu0 0.0
    %239 = vmatpush1.msra.mxu0 %v41
    %240 = vmatprep.subr.mxu0 0.0
    %241 = vmatpush1.msra.mxu0 %v42
    %242 = vmatprep.subr.mxu0 0.0
    %243 = vmatpush1.msra.mxu0 %v43
    %244 = vmatprep.subr.mxu0 0.0
    %245 = vmatpush1.msra.mxu0 %v44
    %246 = vmatprep.subr.mxu0 0.0
    %247 = vmatpush1.msra.mxu0 %v45
    %248 = vmatprep.subr.mxu0 0.0
    %249 = vmatpush1.msra.mxu0 %v46
    %250 = vmatprep.subr.mxu0 0.0
    %251 = vmatpush1.msra.mxu0 %v47
    %252 = vmatprep.subr.mxu0 0.0
    %253 = vmatpush1.msra.mxu0 %v48
    %254 = vmatprep.subr.mxu0 0.0
    %255 = vmatpush1.msra.mxu0 %v49
    %256 = vmatprep.subr.mxu0 0.0
    %257 = vmatpush1.msra.mxu0 %v50
    %258 = vmatprep.subr.mxu0 0.0
    %259 = vmatpush1.msra.mxu0 %v51
    %260 = vmatprep.subr.mxu0 0.0
    %261 = vmatpush1.msra.mxu0 %v52
    %262 = vmatprep.subr.mxu0 0.0
    %263 = vmatpush1.msra.mxu0 %v53
    %264 = vmatprep.subr.mxu0 0.0
    %265 = vmatpush1.msra.mxu0 %v54
    %266 = vmatprep.mubr.f32.mxu0 %v175
    %267 = vmatmul.mubr.f32.gmra.mrb[0].mxu0 %v167
    %v268 = vpop.f32.mrb[0].mxu0
    %v269 = vadd.f32 %v156, %v268
    %v270 = vpop.f32.mrb[0].mxu0
    %271 = vdwg.mxu0
    %272 = vmatprep.subr.mxu0 0.0
    %273 = vmatpush1.msra.mxu0 %v55
    %274 = vmatprep.subr.mxu0 0.0
    %275 = vmatpush1.msra.mxu0 %v56
    %276 = vmatprep.subr.mxu0 0.0
    %277 = vmatpush1.msra.mxu0 %v57
    %278 = vmatprep.subr.mxu0 0.0
    %279 = vmatpush1.msra.mxu0 %v58
    %280 = vmatprep.subr.mxu0 0.0
    %281 = vmatpush1.msra.mxu0 %v59
    %282 = vmatprep.subr.mxu0 0.0
    %283 = vmatpush1.msra.mxu0 %v60
    %284 = vmatprep.subr.mxu0 0.0
    %285 = vmatpush1.msra.mxu0 %v61
    %286 = vmatprep.subr.mxu0 0.0
    %287 = vmatpush1.msra.mxu0 %v62
    %288 = vmatprep.subr.mxu0 0.0
    %289 = vmatpush1.msra.mxu0 %v63
    %290 = vmatprep.subr.mxu0 0.0
    %291 = vmatpush1.msra.mxu0 %v64
    %292 = vmatprep.subr.mxu0 0.0
    %293 = vmatpush1.msra.mxu0 %v65
    %294 = vmatprep.subr.mxu0 0.0
    %295 = vmatpush1.msra.mxu0 %v66
    %296 = vmatprep.subr.mxu0 0.0
    %297 = vmatpush1.msra.mxu0 %v67
    %298 = vmatprep.subr.mxu0 0.0
    %299 = vmatpush1.msra.mxu0 %v68
    %300 = vmatprep.subr.mxu0 0.0
    %301 = vmatpush1.msra.mxu0 %v69
    %302 = vmatprep.subr.mxu0 0.0
    %303 = vmatpush1.msra.mxu0 %v70
    %304 = vmatprep.subr.mxu0 0.0
    %305 = vmatpush1.msra.mxu0 %v71
    %306 = vmatprep.subr.mxu0 0.0
    %307 = vmatpush1.msra.mxu0 %v72
    %308 = vmatprep.subr.mxu0 0.0
    %309 = vmatpush1.msra.mxu0 %v73
    %310 = vmatprep.subr.mxu0 0.0
    %311 = vmatpush1.msra.mxu0 %v74
    %312 = vmatprep.subr.mxu0 0.0
    %313 = vmatpush1.msra.mxu0 %v75
    %314 = vmatprep.subr.mxu0 0.0
    %315 = vmatpush1.msra.mxu0 %v76
    %316 = vmatprep.subr.mxu0 0.0
    %317 = vmatpush1.msra.mxu0 %v77
    %318 = vmatprep.subr.mxu0 0.0
    %319 = vmatpush1.msra.mxu0 %v78
    %320 = vmatprep.subr.mxu0 0.0
    %321 = vmatpush1.msra.mxu0 %v79
    %322 = vmatprep.subr.mxu0 0.0
    %323 = vmatpush1.msra.mxu0 %v80
    %324 = vmatprep.subr.mxu0 0.0
    %325 = vmatpush1.msra.mxu0 %v81
    %326 = vmatprep.subr.mxu0 0.0
    %327 = vmatpush1.msra.mxu0 %v82
    %328 = vmatprep.subr.mxu0 0.0
    %329 = vmatpush1.msra.mxu0 %v83
    %330 = vmatprep.subr.mxu0 0.0
    %331 = vmatpush1.msra.mxu0 %v84
    %332 = vmatprep.subr.mxu0 0.0
    %333 = vmatpush1.msra.mxu0 %v85
    %334 = vmatprep.subr.mxu0 0.0
    %335 = vmatpush1.msra.mxu0 %v86
    %336 = vmatprep.mubr.f32.mxu0 %v176
    %337 = vmatmul.mubr.f32.gmra.mrb[0].mxu0 %v174
    %v338 = vpop.f32.mrb[0].mxu0
    %v339 = vadd.f32 %v269, %v338
    %v340 = vpop.f32.mrb[0].mxu0
    %341 = vdwg.mxu0
    %342 = vmatprep.subr.mxu0 0.0
    %343 = vmatpush1.msra.mxu0 %v87
    %344 = vmatprep.subr.mxu0 0.0
    %345 = vmatpush1.msra.mxu0 %v88
    %346 = vmatprep.subr.mxu0 0.0
    %347 = vmatpush1.msra.mxu0 %v89
    %348 = vmatprep.subr.mxu0 0.0
    %349 = vmatpush1.msra.mxu0 %v90
    %350 = vmatprep.subr.mxu0 0.0
    %351 = vmatpush1.msra.mxu0 %v91
    %352 = vmatprep.subr.mxu0 0.0
    %353 = vmatpush1.msra.mxu0 %v92
    %354 = vmatprep.subr.mxu0 0.0
    %355 = vmatpush1.msra.mxu0 %v93
    %356 = vmatprep.subr.mxu0 0.0
    %357 = vmatpush1.msra.mxu0 %v94
    %358 = vmatprep.subr.mxu0 0.0
    %359 = vmatpush1.msra.mxu0 %v95
    %360 = vmatprep.subr.mxu0 0.0
    %361 = vmatpush1.msra.mxu0 %v96
    %362 = vmatprep.subr.mxu0 0.0
    %363 = vmatpush1.msra.mxu0 %v97
    %364 = vmatprep.subr.mxu0 0.0
    %365 = vmatpush1.msra.mxu0 %v98
    %366 = vmatprep.subr.mxu0 0.0
    %367 = vmatpush1.msra.mxu0 %v99
    %368 = vmatprep.subr.mxu0 0.0
    %369 = vmatpush1.msra.mxu0 %v100
    %370 = vmatprep.subr.mxu0 0.0
    %371 = vmatpush1.msra.mxu0 %v101
    %372 = vmatprep.subr.mxu0 0.0
    %373 = vmatpush1.msra.mxu0 %v102
    %374 = vmatprep.subr.mxu0 0.0
    %375 = vmatpush1.msra.mxu0 %v103
    %376 = vmatprep.subr.mxu0 0.0
    %377 = vmatpush1.msra.mxu0 %v104
    %378 = vmatprep.subr.mxu0 0.0
    %379 = vmatpush1.msra.mxu0 %v105
    %380 = vmatprep.subr.mxu0 0.0
    %381 = vmatpush1.msra.mxu0 %v106
    %382 = vmatprep.subr.mxu0 0.0
    %383 = vmatpush1.msra.mxu0 %v107
    %384 = vmatprep.subr.mxu0 0.0
    %385 = vmatpush1.msra.mxu0 %v108
    %386 = vmatprep.subr.mxu0 0.0
    %387 = vmatpush1.msra.mxu0 %v109
    %388 = vmatprep.subr.mxu0 0.0
    %389 = vmatpush1.msra.mxu0 %v110
    %390 = vmatprep.subr.mxu0 0.0
    %391 = vmatpush1.msra.mxu0 %v111
    %392 = vmatprep.subr.mxu0 0.0
    %393 = vmatpush1.msra.mxu0 %v112
    %394 = vmatprep.subr.mxu0 0.0
    %395 = vmatpush1.msra.mxu0 %v113
    %396 = vmatprep.subr.mxu0 0.0
    %397 = vmatpush1.msra.mxu0 %v114
    %398 = vmatprep.subr.mxu0 0.0
    %399 = vmatpush1.msra.mxu0 %v115
    %400 = vmatprep.subr.mxu0 0.0
    %401 = vmatpush1.msra.mxu0 %v116
    %402 = vmatprep.subr.mxu0 0.0
    %403 = vmatpush1.msra.mxu0 %v117
    %404 = vmatprep.subr.mxu0 0.0
    %405 = vmatpush1.msra.mxu0 %v118
    %406 = vmatprep.mubr.f32.mxu0 %v192
    %407 = vmatmul.mubr.f32.gmra.mrb[0].mxu0 %v184
    %v408 = vpop.f32.mrb[0].mxu0
    %v409 = vadd.f32 %v339, %v408
    %v410 = vpop.f32.mrb[0].mxu0
    %411 = vdwg.mxu0
    %412 = vmatprep.subr.mxu0 0.0
    %413 = vmatpush1.msra.mxu0 %v119
    %414 = vmatprep.subr.mxu0 0.0
    %415 = vmatpush1.msra.mxu0 %v120
    %416 = vmatprep.subr.mxu0 0.0
    %417 = vmatpush1.msra.mxu0 %v121
    %418 = vmatprep.subr.mxu0 0.0
    %419 = vmatpush1.msra.mxu0 %v122
    %420 = vmatprep.subr.mxu0 0.0
    %421 = vmatpush1.msra.mxu0 %v123
    %422 = vmatprep.subr.mxu0 0.0
    %423 = vmatpush1.msra.mxu0 %v124
    %424 = vmatprep.subr.mxu0 0.0
    %425 = vmatpush1.msra.mxu0 %v125
    %426 = vmatprep.subr.mxu0 0.0
    %427 = vmatpush1.msra.mxu0 %v126
    %428 = vmatprep.subr.mxu0 0.0
    %429 = vmatpush1.msra.mxu0 %v127
    %430 = vmatprep.subr.mxu0 0.0
    %431 = vmatpush1.msra.mxu0 %v128
    %432 = vmatprep.subr.mxu0 0.0
    %433 = vmatpush1.msra.mxu0 %v129
    %434 = vmatprep.subr.mxu0 0.0
    %435 = vmatpush1.msra.mxu0 %v130
    %436 = vmatprep.subr.mxu0 0.0
    %437 = vmatpush1.msra.mxu0 %v131
    %438 = vmatprep.subr.mxu0 0.0
    %439 = vmatpush1.msra.mxu0 %v132
    %440 = vmatprep.subr.mxu0 0.0
    %441 = vmatpush1.msra.mxu0 %v133
    %442 = vmatprep.subr.mxu0 0.0
    %443 = vmatpush1.msra.mxu0 %v134
    %444 = vmatprep.subr.mxu0 0.0
    %445 = vmatpush1.msra.mxu0 %v135
    %446 = vmatprep.subr.mxu0 0.0
    %447 = vmatpush1.msra.mxu0 %v136
    %448 = vmatprep.subr.mxu0 0.0
    %449 = vmatpush1.msra.mxu0 %v137
    %450 = vmatprep.subr.mxu0 0.0
    %451 = vmatpush1.msra.mxu0 %v138
    %452 = vmatprep.subr.mxu0 0.0
    %453 = vmatpush1.msra.mxu0 %v139
    %454 = vmatprep.subr.mxu0 0.0
    %455 = vmatpush1.msra.mxu0 %v140
    %456 = vmatprep.subr.mxu0 0.0
    %457 = vmatpush1.msra.mxu0 %v141
    %458 = vmatprep.subr.mxu0 0.0
    %459 = vmatpush1.msra.mxu0 %v142
    %460 = vmatprep.subr.mxu0 0.0
    %461 = vmatpush1.msra.mxu0 %v143
    %462 = vmatprep.subr.mxu0 0.0
    %463 = vmatpush1.msra.mxu0 %v144
    %464 = vmatprep.subr.mxu0 0.0
    %465 = vmatpush1.msra.mxu0 %v145
    %466 = vmatprep.subr.mxu0 0.0
    %467 = vmatpush1.msra.mxu0 %v146
    %468 = vmatprep.subr.mxu0 0.0
    %469 = vmatpush1.msra.mxu0 %v147
    %470 = vmatprep.subr.mxu0 0.0
    %471 = vmatpush1.msra.mxu0 %v148
    %472 = vmatprep.subr.mxu0 0.0
    %473 = vmatpush1.msra.mxu0 %v149
    %474 = vmatprep.subr.mxu0 0.0
    %475 = vmatpush1.msra.mxu0 %v150
    %476 = vmatprep.mubr.f32.mxu0 %v193
    %477 = vmatmul.mubr.f32.gmra.mrb[0].mxu0 %v191
    %v478 = vpop.f32.mrb[0].mxu0
    %v479 = vadd.f32 %v409, %v478
    %v480 = vpop.f32.mrb[0].mxu0
    %481 = vdwg.mxu0
    %v482 = vmax.f32 %v479, 0.0
    %v483 = vld [vmem:[%s3] sm:$0xff]
    %v484 = vld [vmem:[%s3 + $0x8] sm:$0xff]
    %v485 = vld [vmem:[%s3 + $0x10] sm:$0xff]
    %v486 = vld [vmem:[%s3 + $0x18] sm:$0xff]
    %v487 = vld [vmem:[%s4] sm:$0x1]
    %v489 = vlaneseq
    %v490 = vshrl.u32 %v489, 7
    %v491 = vsub.s32 0, %v490
    %v492 = vrot.slane %v487, %v491
    %vm494 = vcmask 261120
    %v496 = vsel %vm494, %v482, 0
    %498 = vmatprep.subr.mxu0 0.0
    %499 = vmatpush1.msra.mxu0 %v483
    %500 = vmatprep.subr.mxu0 0.0
    %501 = vmatpush1.msra.mxu0 %v484
    %502 = vmatprep.subr.mxu0 0.0
    %503 = vmatpush1.msra.mxu0 %v485
    %504 = vmatprep.subr.mxu0 0.0
    %505 = vmatpush1.msra.mxu0 %v486
    %506 = vmatprep.subr.mxu0 0.0
    %507 = vmatpush1.msra.mxu0 0.0
    %508 = vmatprep.subr.mxu0 0.0
    %509 = vmatpush1.msra.mxu0 0.0
    %510 = vmatprep.subr.mxu0 0.0
    %511 = vmatpush1.msra.mxu0 0.0
    %512 = vmatprep.subr.mxu0 0.0
    %513 = vmatpush1.msra.mxu0 0.0
    %514 = vmatprep.subr.mxu0 0.0
    %515 = vmatpush1.msra.mxu0 0.0
    %516 = vmatprep.subr.mxu0 0.0
    %517 = vmatpush1.msra.mxu0 0.0
    %518 = vmatprep.subr.mxu0 0.0
    %519 = vmatpush1.msra.mxu0 0.0
    %520 = vmatprep.subr.mxu0 0.0
    %521 = vmatpush1.msra.mxu0 0.0
    %522 = vmatprep.subr.mxu0 0.0
    %523 = vmatpush1.msra.mxu0 0.0
    %524 = vmatprep.subr.mxu0 0.0
    %525 = vmatpush1.msra.mxu0 0.0
    %526 = vmatprep.subr.mxu0 0.0
    %527 = vmatpush1.msra.mxu0 0.0
    %528 = vmatprep.subr.mxu0 0.0
    %529 = vmatpush1.msra.mxu0 0.0
    %530 = vmatprep.subr.mxu0 0.0
    %531 = vmatpush1.msra.mxu0 0.0
    %532 = vmatprep.subr.mxu0 0.0
    %533 = vmatpush1.msra.mxu0 0.0
    %534 = vmatprep.subr.mxu0 0.0
    %535 = vmatpush1.msra.mxu0 0.0
    %536 = vmatprep.subr.mxu0 0.0
    %537 = vmatpush1.msra.mxu0 0.0
    %538 = vmatprep.subr.mxu0 0.0
    %539 = vmatpush1.msra.mxu0 0.0
    %540 = vmatprep.subr.mxu0 0.0
    %541 = vmatpush1.msra.mxu0 0.0
    %542 = vmatprep.subr.mxu0 0.0
    %543 = vmatpush1.msra.mxu0 0.0
    %544 = vmatprep.subr.mxu0 0.0
    %545 = vmatpush1.msra.mxu0 0.0
    %546 = vmatprep.subr.mxu0 0.0
    %547 = vmatpush1.msra.mxu0 0.0
    %548 = vmatprep.subr.mxu0 0.0
    %549 = vmatpush1.msra.mxu0 0.0
    %550 = vmatprep.subr.mxu0 0.0
    %551 = vmatpush1.msra.mxu0 0.0
    %552 = vmatprep.subr.mxu0 0.0
    %553 = vmatpush1.msra.mxu0 0.0
    %554 = vmatprep.subr.mxu0 0.0
    %555 = vmatpush1.msra.mxu0 0.0
    %556 = vmatprep.subr.mxu0 0.0
    %557 = vmatpush1.msra.mxu0 0.0
    %558 = vmatprep.subr.mxu0 0.0
    %559 = vmatpush1.msra.mxu0 0.0
    %560 = vmatprep.subr.mxu0 0.0
    %561 = vmatpush1.msra.mxu0 0.0
    %562 = vmatprep.mubr.f32.mxu0 0.0
    %563 = vmatmul.mubr.f32.gmra.mrb[0].mxu0 %v496
    %v564 = vpop.f32.mrb[0].mxu0
    %v565 = vadd.f32 %v492, %v564
    %v566 = vpop.f32.mrb[0].mxu0
    %567 = vdwg.mxu0
    %vm568 = vcmask 74752
    %569 = vst.msk [vmem:[#allocation2] sm:$0x3] %vm568, %v565
    // Predicated region
    $region22: #{_lambda_.5} parent=1 // pred_check
      _
    $region23: #{_lambda_.5} parent=1 // pred_check_branch
      %571 = sbr.rel (0) target = $region25
    $region24: #{_lambda_.5} parent=1 // pred_region
      %s573 = ssub.s32 32, 32
      %574 = vsyncadd [#allocation3], %s573
      %s576 = sshll.u32 [#allocation2], 4
      %s577 = int_to_ptr.vmem [resolvable:$true] %s576
      %579 = dma.vmem_to_hbm [thread:$0]  %s577, 32, %s5, [#allocation3]
    $region25: #{_lambda_.5} parent=1 // pred_fallthru
      _
    // Predicated region
    $region26: #{_lambda_.5} parent=1 // pred_check
      _
    $region27: #{_lambda_.5} parent=1 // pred_check_branch
      %581 = sbr.rel (0) target = $region29
    $region28: #{_lambda_.5} parent=1 // pred_region
      %582 = dma.done [#allocation3], 32
    $region29: #{_lambda_.5} parent=1 // pred_fallthru
      _
    %583 = vsyncpa [#allocation3], 1

</llo_original>
